<compile_context>
chip_gen: v5e
topology: v5e:2x2
jax: 0.10.0
libtpu: 0.0.40
codegen_flags: <defaults>
</compile_context>

<pallas_src>
import jax
import jax.numpy as jnp
from jax.experimental import pallas as pl
from jax.experimental.pallas import tpu as pltpu


def _round_up(x, m):
    return ((x + m - 1) // m) * m


# ----------------------------------------------------------------------------
# Pallas kernel: one grid step handles a block of bb batch elements, folded
# into the sublane (row) axis so every matmul has a large M dim.
#   pp   = patch_2d @ W1p          (bb*P, Hp)    bf16 x bf16 -> f32 acc
#   hn   = nodes_2d @ W1n          (bb*N, Hp)    bf16 x bf16 -> f32 acc
#   agg  = S_blk @ pp              (bb*N, Hp)    block-diag scatter-mean, ONE matmul
#   h    = relu(hn + agg + b1)
#   out  = h @ W2_pad + b2_pad     (bb*N, HORp)  lane-dense, unmasked stores
# ----------------------------------------------------------------------------
def _readout_kernel(s_ref, patch_ref, nodes_ref,
                    w1n_ref, w1p_ref, b1_ref, w2_ref, b2_ref, out_ref):
    pp = jnp.dot(patch_ref[...], w1p_ref[...],
                 preferred_element_type=jnp.float32)            # (bb*P, Hp) f32
    hn = jnp.dot(nodes_ref[...], w1n_ref[...],
                 preferred_element_type=jnp.float32)            # (bb*N, Hp) f32

    # scatter-mean for the whole batch block in a single MXU call (bf16)
    agg = jnp.dot(s_ref[...], pp.astype(s_ref.dtype),
                  preferred_element_type=jnp.float32)           # (bb*N, Hp) f32

    h = jnp.maximum(hn + agg + b1_ref[...], 0.0)                # ReLU, f32

    out = jnp.dot(h.astype(w2_ref.dtype), w2_ref[...],
                  preferred_element_type=jnp.float32) + b2_ref[...]
    out_ref[...] = out.astype(out_ref.dtype)                    # (bb*N, HORp)


# ----------------------------------------------------------------------------
# VMEM-budget-aware batch blocking.
# ----------------------------------------------------------------------------
def _vmem_budget_bytes():
    try:
        cap = int(pltpu.get_tpu_info().vmem_capacity_bytes)
    except Exception:
        cap = 64 << 20            # conservative: v7x has 64 MiB per TensorCore
    limit = min(int(cap * 0.85), 100 << 20)   # explicit scoped-VMEM limit
    budget = int(limit * 0.80)                # headroom for compiler scratch
    return budget, limit


def _step_vmem_bytes(bb, N, P, TFn, TFp, H, HOR, out_bytes):
    # streaming blocks are double-buffered by the pipeline
    stream = 2 * (bb * P * TFp * 2 + bb * N * TFn * 2 + bb * N * HOR * out_bytes)
    # constant operands are single-buffered (pl.Buffered(1))
    const = (bb * N * bb * P * 2
             + TFn * H * 2 + TFp * H * 2 + H * HOR * 2 + H * 4 + HOR * 4)
    # f32 compute temporaries inside the kernel body (pp, hn, agg, h, out)
    temps = 4 * (bb * P * H + 3 * bb * N * H + bb * N * HOR)
    return stream + const + temps


def _choose_block_b(B, N, P, TFn, TFp, H, HOR, out_bytes, budget):
    """Largest batch block whose per-step resident set fits the VMEM budget.
    The batch is zero-padded to a multiple of block_b, so no divisor fallback
    to block_b=1 for awkward (prime/odd) B."""
    bb = B
    while bb > 1 and _step_vmem_bytes(bb, N, P, TFn, TFp, H, HOR, out_bytes) > budget:
        bb -= 1
    return bb


# ----------------------------------------------------------------------------
# Wrapper
# ----------------------------------------------------------------------------
def single_node_readout(patch_x, nodes_x, subgraphs_batch, subgraphs_nodes_mapper,
                        n_nodes, w1, b1, w2, b2, *, block_b=None,
                        out_dtype=jnp.float32):
    """
    patch_x: (B, T, P, Fp) float32
    nodes_x: (B, T, N, Fn) float32
    subgraphs_batch / subgraphs_nodes_mapper: (E,) int32 index arrays (topo_data)
    w1: (T*Fn + T*Fp, H), b1: (H,), w2: (H, horizon), b2: (horizon,)
    returns: (B, N, horizon) in out_dtype (float32 by default; bf16 halves the
             output writeback if downstream tolerates it)
    """
    B, T, P, Fp = patch_x.shape
    _, _, N, Fn = nodes_x.shape
    assert N == n_nodes
    TFn, TFp = T * Fn, T * Fp
    assert w1.shape[0] == TFn + TFp
    H = w1.shape[1]
    HOR = w2.shape[1]

    # padded static sizes: lane (last) dims to 128, sublane-grain dims to 8
    N_pad = _round_up(N, 8)
    P_pad = _round_up(P, 8)
    TFn_pad = _round_up(TFn, 128)
    TFp_pad = _round_up(TFp, 128)
    H_pad = _round_up(H, 128)
    HOR_pad = _round_up(HOR, 128)

    out_bytes = jnp.dtype(out_dtype).itemsize
    budget, vmem_limit = _vmem_budget_bytes()

    if block_b is None:
        block_b = _choose_block_b(B, N_pad, P_pad, TFn_pad, TFp_pad,
                                  H_pad, HOR_pad, out_bytes, budget)
        grid_steps = -(-B // block_b)
        # keep the step count even when > 1 so ("parallel",) load-balances
        # across the 2 TensorCores on v7x (no cost on single-core v5e/v6e)
        if grid_steps > 1 and grid_steps % 2 == 1:
            grid_steps += 1
            block_b = -(-B // grid_steps)
    else:
        grid_steps = -(-B // block_b)
    B_pad = block_b * grid_steps

    # --- glue: dense scatter-mean matrix S (N_pad, P_pad) -> block-diag bf16 ---
    E = subgraphs_nodes_mapper.shape[0]
    ones = jnp.ones((E,), jnp.float32)
    counts = jnp.zeros((N_pad, P_pad), jnp.float32).at[
        subgraphs_nodes_mapper, subgraphs_batch].add(ones)
    deg = jnp.zeros((N_pad,), jnp.float32).at[subgraphs_nodes_mapper].add(ones)
    S = counts / jnp.maximum(deg, 1.0)[:, None]          # guard empty nodes
    S_blk = jnp.kron(jnp.eye(block_b, dtype=jnp.float32), S).astype(jnp.bfloat16)

    # --- glue: 'B t n f -> (B n) (t f)' slabs, bf16, zero-padded ---
    def fold(x, n_pad, feat_pad):
        x = x.astype(jnp.bfloat16)                # cast first: half the copy bytes
        Bx, Tx, nx, Fx = x.shape
        x = jnp.pad(x, ((0, B_pad - Bx), (0, 0), (0, n_pad - nx), (0, 0)))
        x = jnp.transpose(x, (0, 2, 1, 3)).reshape(B_pad * n_pad, Tx * Fx)
        return jnp.pad(x, ((0, 0), (0, feat_pad - Tx * Fx)))

    patch_2d = fold(patch_x, P_pad, TFp_pad)      # (B_pad*P_pad, TFp_pad) bf16
    nodes_2d = fold(nodes_x, N_pad, TFn_pad)      # (B_pad*N_pad, TFn_pad) bf16

    # --- glue: split W1 at the concat boundary (nodes first, then patch), pad ---
    w1n = jnp.zeros((TFn_pad, H_pad), jnp.bfloat16).at[:TFn, :H].set(
        w1[:TFn].astype(jnp.bfloat16))
    w1p = jnp.zeros((TFp_pad, H_pad), jnp.bfloat16).at[:TFp, :H].set(
        w1[TFn:].astype(jnp.bfloat16))
    b1_2d = jnp.zeros((1, H_pad), jnp.float32).at[:, :H].set(
        b1.reshape(1, H).astype(jnp.float32))
    w2_pad = jnp.zeros((H_pad, HOR_pad), jnp.bfloat16).at[:H, :HOR].set(
        w2.astype(jnp.bfloat16))
    b2_pad = jnp.zeros((1, HOR_pad), jnp.float32).at[:, :HOR].set(
        b2.reshape(1, HOR).astype(jnp.float32))

    def _specs(single_buffer_consts):
        ck = {"pipeline_mode": pl.Buffered(1)} if single_buffer_consts else {}
        in_specs = [
            pl.BlockSpec((block_b * N_pad, block_b * P_pad), lambda i: (0, 0), **ck),
            pl.BlockSpec((block_b * P_pad, TFp_pad), lambda i: (i, 0)),
            pl.BlockSpec((block_b * N_pad, TFn_pad), lambda i: (i, 0)),
            pl.BlockSpec((TFn_pad, H_pad), lambda i: (0, 0), **ck),
            pl.BlockSpec((TFp_pad, H_pad), lambda i: (0, 0), **ck),
            pl.BlockSpec((1, H_pad), lambda i: (0, 0), **ck),
            pl.BlockSpec((H_pad, HOR_pad), lambda i: (0, 0), **ck),
            pl.BlockSpec((1, HOR_pad), lambda i: (0, 0), **ck),
        ]
        out_spec = pl.BlockSpec((block_b * N_pad, HOR_pad), lambda i: (i, 0))
        return in_specs, out_spec

    def _call(single_buffer_consts):
        in_specs, out_spec = _specs(single_buffer_consts)
        return pl.pallas_call(
            _readout_kernel,
            out_shape=jax.ShapeDtypeStruct((B_pad * N_pad, HOR_pad), out_dtype),
            grid_spec=pltpu.PrefetchScalarGridSpec(
                num_scalar_prefetch=0,
                grid=(grid_steps,),
                in_specs=in_specs,
                out_specs=out_spec,
            ),
            compiler_params=pltpu.CompilerParams(
                dimension_semantics=("parallel",),
                vmem_limit_bytes=int(vmem_limit),
            ),
        )(S_blk, patch_2d, nodes_2d, w1n, w1p, b1_2d, w2_pad, b2_pad)

    try:
        out2d = _call(True)       # constants single-buffered (pl.Buffered(1))
    except Exception:
        out2d = _call(False)      # fallback if pipeline_mode is unsupported

    return out2d.reshape(B_pad, N_pad, HOR_pad)[:B, :N, :HOR]


# ----------------------------------------------------------------------------
# Pure-JAX f32 reference (mirrors the PyTorch forward) for verification.
# ----------------------------------------------------------------------------
def _reference(patch_x, nodes_x, subgraphs_batch, subgraphs_nodes_mapper,
               n_nodes, w1, b1, w2, b2):
    B, T, P, Fp = patch_x.shape
    _, _, N, Fn = nodes_x.shape
    gathered = patch_x[:, :, subgraphs_batch, :]                  # (B, T, E, Fp)
    pn_sum = jnp.zeros((B, T, N, Fp), jnp.float32).at[
        :, :, subgraphs_nodes_mapper, :].add(gathered)            # scatter add
    deg = jnp.zeros((N,), jnp.float32).at[subgraphs_nodes_mapper].add(1.0)
    pn = pn_sum / jnp.maximum(deg, 1.0)[None, None, :, None]      # scatter mean
    pn = jnp.transpose(pn, (0, 2, 1, 3)).reshape(B, N, T * Fp)    # B n (t f)
    nx = jnp.transpose(nodes_x, (0, 2, 1, 3)).reshape(B, N, T * Fn)
    x = jnp.concatenate([nx, pn], axis=-1)
    h = jnp.maximum(x @ w1 + b1, 0.0)
    return h @ w2 + b2


if __name__ == "__main__":
    # small, deterministic example shapes
    B, T = 8, 4
    P, N = 8, 16          # n_patches, n_nodes
    Fp, Fn = 4, 4         # n_features_patch, n_features_node
    HOR = 8               # horizon
    in_dim = T * Fn + T * Fp
    H = in_dim            # hidden = in_dim (MLP: Linear -> ReLU -> Linear)

    key = jax.random.PRNGKey(0)
    k1, k2, k3, k4, k5, k6 = jax.random.split(key, 6)

    patch_x = jax.random.normal(k1, (B, T, P, Fp), jnp.float32)
    nodes_x = jax.random.normal(k2, (B, T, N, Fn), jnp.float32)

    # deterministic topo_data: every node appears in exactly 2 subgraph entries
    E = 2 * N
    subgraphs_nodes_mapper = (jnp.arange(E, dtype=jnp.int32) % N)
    subgraphs_batch = ((jnp.arange(E, dtype=jnp.int32) * 3 + 1) % P)

    # deterministic MLP parameters (synthetic; no checkpoint)
    w1 = jax.random.normal(k3, (in_dim, H), jnp.float32) * 0.1
    b1 = jax.random.normal(k4, (H,), jnp.float32) * 0.1
    w2 = jax.random.normal(k5, (H, HOR), jnp.float32) * 0.1
    b2 = jax.random.normal(k6, (HOR,), jnp.float32) * 0.1
    # TODO(synk): the repo MLP may include BatchNorm between layers; norm and
    # dropout (dropout=0.0, eval mode) are omitted here.

    out = single_node_readout(patch_x, nodes_x, subgraphs_batch,
                              subgraphs_nodes_mapper, N, w1, b1, w2, b2)
    out = jax.block_until_ready(out)

    ref = _reference(patch_x, nodes_x, subgraphs_batch,
                     subgraphs_nodes_mapper, N, w1, b1, w2, b2)
    assert out.shape == (B, N, HOR)
    max_err = float(jnp.max(jnp.abs(out - ref)))
    # tolerance accounts for bf16 inputs/weights/S with f32 accumulation
    assert jnp.allclose(out, ref, rtol=3e-2, atol=3e-2), f"max_err={max_err}"
    print("KERNEL_OK")
</pallas_src>

<mosaic_0001>
module attributes {stable_mosaic.version = 11 : i64} {
  func.func @_readout_kernel(%arg0: i32, %arg1: memref<128x64xbf16, #tpu.memory_space<vmem>>, %arg2: memref<64x128xbf16, #tpu.memory_space<vmem>>, %arg3: memref<128x128xbf16, #tpu.memory_space<vmem>>, %arg4: memref<128x128xbf16, #tpu.memory_space<vmem>>, %arg5: memref<128x128xbf16, #tpu.memory_space<vmem>>, %arg6: memref<1x128xf32, #tpu.memory_space<vmem>>, %arg7: memref<128x128xbf16, #tpu.memory_space<vmem>>, %arg8: memref<1x128xf32, #tpu.memory_space<vmem>>, %arg9: memref<128x128xf32, #tpu.memory_space<vmem>>) attributes {dimension_semantics = [#tpu.dimension_semantics<parallel>], iteration_bounds = array<i64: 1>, scalar_prefetch = 0 : i64, scratch_operands = 0 : i64, tpu.core_type = #tpu.core_type<tc>, window_params = [{pipeline_mode = #tpu.pipeline_mode<synchronous>, transform_indices = @transform_0, window_bounds = array<i64: 128, 64>}, {transform_indices = @transform_1, window_bounds = array<i64: 64, 128>}, {transform_indices = @transform_2, window_bounds = array<i64: 128, 128>}, {pipeline_mode = #tpu.pipeline_mode<synchronous>, transform_indices = @transform_3, window_bounds = array<i64: 128, 128>}, {pipeline_mode = #tpu.pipeline_mode<synchronous>, transform_indices = @transform_4, window_bounds = array<i64: 128, 128>}, {pipeline_mode = #tpu.pipeline_mode<synchronous>, transform_indices = @transform_5, window_bounds = array<i64: 1, 128>}, {pipeline_mode = #tpu.pipeline_mode<synchronous>, transform_indices = @transform_6, window_bounds = array<i64: 128, 128>}, {pipeline_mode = #tpu.pipeline_mode<synchronous>, transform_indices = @transform_7, window_bounds = array<i64: 1, 128>}, {transform_indices = @transform_8, window_bounds = array<i64: 128, 128>}]} {
    %c0 = arith.constant 0 : index
    %c0_0 = arith.constant 0 : index
    %0 = vector.load %arg2[%c0, %c0_0] : memref<64x128xbf16, #tpu.memory_space<vmem>>, vector<64x128xbf16>
    %c0_1 = arith.constant 0 : index
    %c0_2 = arith.constant 0 : index
    %1 = vector.load %arg5[%c0_1, %c0_2] : memref<128x128xbf16, #tpu.memory_space<vmem>>, vector<128x128xbf16>
    %cst = arith.constant dense<0.000000e+00> : vector<64x128xf32>
    %2 = tpu.matmul %0, %1, %cst {dimension_numbers = #tpu.dot_dimension_numbers<[1], [0], [0], [1], [0, 0, 1, 1], [], []>} : vector<64x128xbf16>, vector<128x128xbf16>, vector<64x128xf32> -> vector<64x128xf32>
    %c0_3 = arith.constant 0 : index
    %c0_4 = arith.constant 0 : index
    %3 = vector.load %arg3[%c0_3, %c0_4] : memref<128x128xbf16, #tpu.memory_space<vmem>>, vector<128x128xbf16>
    %c0_5 = arith.constant 0 : index
    %c0_6 = arith.constant 0 : index
    %4 = vector.load %arg4[%c0_5, %c0_6] : memref<128x128xbf16, #tpu.memory_space<vmem>>, vector<128x128xbf16>
    %cst_7 = arith.constant dense<0.000000e+00> : vector<128x128xf32>
    %5 = tpu.matmul %3, %4, %cst_7 {dimension_numbers = #tpu.dot_dimension_numbers<[1], [0], [0], [1], [0, 0, 1, 1], [], []>} : vector<128x128xbf16>, vector<128x128xbf16>, vector<128x128xf32> -> vector<128x128xf32>
    %c0_8 = arith.constant 0 : index
    %c0_9 = arith.constant 0 : index
    %6 = vector.load %arg1[%c0_8, %c0_9] : memref<128x64xbf16, #tpu.memory_space<vmem>>, vector<128x64xbf16>
    %7 = arith.truncf %2 : vector<64x128xf32> to vector<64x128xbf16>
    %cst_10 = arith.constant dense<0.000000e+00> : vector<128x128xf32>
    %8 = tpu.matmul %6, %7, %cst_10 {dimension_numbers = #tpu.dot_dimension_numbers<[1], [0], [0], [1], [0, 0, 1, 1], [], []>} : vector<128x64xbf16>, vector<64x128xbf16>, vector<128x128xf32> -> vector<128x128xf32>
    %9 = arith.addf %5, %8 : vector<128x128xf32>
    %c0_11 = arith.constant 0 : index
    %c0_12 = arith.constant 0 : index
    %10 = vector.load %arg6[%c0_11, %c0_12] : memref<1x128xf32, #tpu.memory_space<vmem>>, vector<1x128xf32>
    %11 = vector.broadcast %10 : vector<1x128xf32> to vector<128x128xf32>
    %12 = arith.addf %9, %11 : vector<128x128xf32>
    %cst_13 = arith.constant 0.000000e+00 : f32
    %13 = vector.broadcast %cst_13 : f32 to vector<128x128xf32>
    %14 = arith.maximumf %12, %13 : vector<128x128xf32>
    %15 = arith.truncf %14 : vector<128x128xf32> to vector<128x128xbf16>
    %c0_14 = arith.constant 0 : index
    %c0_15 = arith.constant 0 : index
    %16 = vector.load %arg7[%c0_14, %c0_15] : memref<128x128xbf16, #tpu.memory_space<vmem>>, vector<128x128xbf16>
    %cst_16 = arith.constant dense<0.000000e+00> : vector<128x128xf32>
    %17 = tpu.matmul %15, %16, %cst_16 {dimension_numbers = #tpu.dot_dimension_numbers<[1], [0], [0], [1], [0, 0, 1, 1], [], []>} : vector<128x128xbf16>, vector<128x128xbf16>, vector<128x128xf32> -> vector<128x128xf32>
    %c0_17 = arith.constant 0 : index
    %c0_18 = arith.constant 0 : index
    %18 = vector.load %arg8[%c0_17, %c0_18] : memref<1x128xf32, #tpu.memory_space<vmem>>, vector<1x128xf32>
    %19 = vector.broadcast %18 : vector<1x128xf32> to vector<128x128xf32>
    %20 = arith.addf %17, %19 : vector<128x128xf32>
    %c0_19 = arith.constant 0 : index
    %c0_20 = arith.constant 0 : index
    %21 = vector.load %arg9[%c0_19, %c0_20] : memref<128x128xf32, #tpu.memory_space<vmem>>, vector<128x128xf32>
    tpu.vector_store %arg9[%c0_19, %c0_20], %20 {strides = array<i32>} : memref<128x128xf32, #tpu.memory_space<vmem>>, vector<128x128xf32>,
    return
  }
  func.func @transform_0(%arg0: i32) -> (i32, i32) {
    %c0_i32 = arith.constant 0 : i32
    %c0_i32_0 = arith.constant 0 : i32
    %c0_i32_1 = arith.constant 0 : i32
    return %c0_i32, %c0_i32_0 : i32, i32
  }
  func.func @transform_1(%arg0: i32) -> (i32, i32) {
    %c0_i32 = arith.constant 0 : i32
    %c0_i32_0 = arith.constant 0 : i32
    return %arg0, %c0_i32 : i32, i32
  }
  func.func @transform_2(%arg0: i32) -> (i32, i32) {
    %c0_i32 = arith.constant 0 : i32
    %c0_i32_0 = arith.constant 0 : i32
    return %arg0, %c0_i32 : i32, i32
  }
  func.func @transform_3(%arg0: i32) -> (i32, i32) {
    %c0_i32 = arith.constant 0 : i32
    %c0_i32_0 = arith.constant 0 : i32
    %c0_i32_1 = arith.constant 0 : i32
    return %c0_i32, %c0_i32_0 : i32, i32
  }
  func.func @transform_4(%arg0: i32) -> (i32, i32) {
    %c0_i32 = arith.constant 0 : i32
    %c0_i32_0 = arith.constant 0 : i32
    %c0_i32_1 = arith.constant 0 : i32
    return %c0_i32, %c0_i32_0 : i32, i32
  }
  func.func @transform_5(%arg0: i32) -> (i32, i32) {
    %c0_i32 = arith.constant 0 : i32
    %c0_i32_0 = arith.constant 0 : i32
    %c0_i32_1 = arith.constant 0 : i32
    return %c0_i32, %c0_i32_0 : i32, i32
  }
  func.func @transform_6(%arg0: i32) -> (i32, i32) {
    %c0_i32 = arith.constant 0 : i32
    %c0_i32_0 = arith.constant 0 : i32
    %c0_i32_1 = arith.constant 0 : i32
    return %c0_i32, %c0_i32_0 : i32, i32
  }
  func.func @transform_7(%arg0: i32) -> (i32, i32) {
    %c0_i32 = arith.constant 0 : i32
    %c0_i32_0 = arith.constant 0 : i32
    %c0_i32_1 = arith.constant 0 : i32
    return %c0_i32, %c0_i32_0 : i32, i32
  }
  func.func @transform_8(%arg0: i32) -> (i32, i32) {
    %c0_i32 = arith.constant 0 : i32
    %c0_i32_0 = arith.constant 0 : i32
    return %arg0, %c0_i32 : i32, i32
  }
}

module attributes {stable_mosaic.version = 11 : i64} {
  func.func @_readout_kernel(%arg0: i32, %arg1: memref<128x64xbf16, #tpu.memory_space<vmem>>, %arg2: memref<64x128xbf16, #tpu.memory_space<vmem>>, %arg3: memref<128x128xbf16, #tpu.memory_space<vmem>>, %arg4: memref<128x128xbf16, #tpu.memory_space<vmem>>, %arg5: memref<128x128xbf16, #tpu.memory_space<vmem>>, %arg6: memref<1x128xf32, #tpu.memory_space<vmem>>, %arg7: memref<128x128xbf16, #tpu.memory_space<vmem>>, %arg8: memref<1x128xf32, #tpu.memory_space<vmem>>, %arg9: memref<128x128xf32, #tpu.memory_space<vmem>>) attributes {dimension_semantics = [#tpu.dimension_semantics<parallel>], iteration_bounds = array<i64: 1>, scalar_prefetch = 0 : i64, scratch_operands = 0 : i64, tpu.core_type = #tpu.core_type<tc>, window_params = [{pipeline_mode = #tpu.pipeline_mode<synchronous>, transform_indices = @transform_0, window_bounds = array<i64: 128, 64>}, {transform_indices = @transform_1, window_bounds = array<i64: 64, 128>}, {transform_indices = @transform_2, window_bounds = array<i64: 128, 128>}, {pipeline_mode = #tpu.pipeline_mode<synchronous>, transform_indices = @transform_3, window_bounds = array<i64: 128, 128>}, {pipeline_mode = #tpu.pipeline_mode<synchronous>, transform_indices = @transform_4, window_bounds = array<i64: 128, 128>}, {pipeline_mode = #tpu.pipeline_mode<synchronous>, transform_indices = @transform_5, window_bounds = array<i64: 1, 128>}, {pipeline_mode = #tpu.pipeline_mode<synchronous>, transform_indices = @transform_6, window_bounds = array<i64: 128, 128>}, {pipeline_mode = #tpu.pipeline_mode<synchronous>, transform_indices = @transform_7, window_bounds = array<i64: 1, 128>}, {transform_indices = @transform_8, window_bounds = array<i64: 128, 128>}]} {
    %c0 = arith.constant 0 : index
    %c0_0 = arith.constant 0 : index
    %0 = vector.load %arg2[%c0, %c0_0] : memref<64x128xbf16, #tpu.memory_space<vmem>>, vector<64x128xbf16>
    %c0_1 = arith.constant 0 : index
    %c0_2 = arith.constant 0 : index
    %1 = vector.load %arg5[%c0_1, %c0_2] : memref<128x128xbf16, #tpu.memory_space<vmem>>, vector<128x128xbf16>
    %cst = arith.constant dense<0.000000e+00> : vector<64x128xf32>
    %2 = tpu.matmul %0, %1, %cst {dimension_numbers = #tpu.dot_dimension_numbers<[1], [0], [0], [1], [0, 0, 1, 1], [], []>} : vector<64x128xbf16>, vector<128x128xbf16>, vector<64x128xf32> -> vector<64x128xf32>
    %c0_3 = arith.constant 0 : index
    %c0_4 = arith.constant 0 : index
    %3 = vector.load %arg3[%c0_3, %c0_4] : memref<128x128xbf16, #tpu.memory_space<vmem>>, vector<128x128xbf16>
    %c0_5 = arith.constant 0 : index
    %c0_6 = arith.constant 0 : index
    %4 = vector.load %arg4[%c0_5, %c0_6] : memref<128x128xbf16, #tpu.memory_space<vmem>>, vector<128x128xbf16>
    %cst_7 = arith.constant dense<0.000000e+00> : vector<128x128xf32>
    %5 = tpu.matmul %3, %4, %cst_7 {dimension_numbers = #tpu.dot_dimension_numbers<[1], [0], [0], [1], [0, 0, 1, 1], [], []>} : vector<128x128xbf16>, vector<128x128xbf16>, vector<128x128xf32> -> vector<128x128xf32>
    %c0_8 = arith.constant 0 : index
    %c0_9 = arith.constant 0 : index
    %6 = vector.load %arg1[%c0_8, %c0_9] : memref<128x64xbf16, #tpu.memory_space<vmem>>, vector<128x64xbf16>
    %7 = arith.truncf %2 : vector<64x128xf32> to vector<64x128xbf16>
    %cst_10 = arith.constant dense<0.000000e+00> : vector<128x128xf32>
    %8 = tpu.matmul %6, %7, %cst_10 {dimension_numbers = #tpu.dot_dimension_numbers<[1], [0], [0], [1], [0, 0, 1, 1], [], []>} : vector<128x64xbf16>, vector<64x128xbf16>, vector<128x128xf32> -> vector<128x128xf32>
    %9 = arith.addf %5, %8 : vector<128x128xf32>
    %c0_11 = arith.constant 0 : index
    %c0_12 = arith.constant 0 : index
    %10 = vector.load %arg6[%c0_11, %c0_12] : memref<1x128xf32, #tpu.memory_space<vmem>>, vector<1x128xf32>
    %11 = vector.broadcast %10 : vector<1x128xf32> to vector<128x128xf32>
    %12 = arith.addf %9, %11 : vector<128x128xf32>
    %cst_13 = arith.constant 0.000000e+00 : f32
    %13 = vector.broadcast %cst_13 : f32 to vector<128x128xf32>
    %14 = arith.maximumf %12, %13 : vector<128x128xf32>
    %15 = arith.truncf %14 : vector<128x128xf32> to vector<128x128xbf16>
    %c0_14 = arith.constant 0 : index
    %c0_15 = arith.constant 0 : index
    %16 = vector.load %arg7[%c0_14, %c0_15] : memref<128x128xbf16, #tpu.memory_space<vmem>>, vector<128x128xbf16>
    %cst_16 = arith.constant dense<0.000000e+00> : vector<128x128xf32>
    %17 = tpu.matmul %15, %16, %cst_16 {dimension_numbers = #tpu.dot_dimension_numbers<[1], [0], [0], [1], [0, 0, 1, 1], [], []>} : vector<128x128xbf16>, vector<128x128xbf16>, vector<128x128xf32> -> vector<128x128xf32>
    %c0_17 = arith.constant 0 : index
    %c0_18 = arith.constant 0 : index
    %18 = vector.load %arg8[%c0_17, %c0_18] : memref<1x128xf32, #tpu.memory_space<vmem>>, vector<1x128xf32>
    %19 = vector.broadcast %18 : vector<1x128xf32> to vector<128x128xf32>
    %20 = arith.addf %17, %19 : vector<128x128xf32>
    %c0_19 = arith.constant 0 : index
    %c0_20 = arith.constant 0 : index
    %21 = vector.load %arg9[%c0_19, %c0_20] : memref<128x128xf32, #tpu.memory_space<vmem>>, vector<128x128xf32>
    tpu.vector_store %arg9[%c0_19, %c0_20], %20 {strides = array<i32>} : memref<128x128xf32, #tpu.memory_space<vmem>>, vector<128x128xf32>,
    return
  }
  func.func @transform_0(%arg0: i32) -> (i32, i32) {
    %c0_i32 = arith.constant 0 : i32
    %c0_i32_0 = arith.constant 0 : i32
    %c0_i32_1 = arith.constant 0 : i32
    return %c0_i32, %c0_i32_0 : i32, i32
  }
  func.func @transform_1(%arg0: i32) -> (i32, i32) {
    %c0_i32 = arith.constant 0 : i32
    %c0_i32_0 = arith.constant 0 : i32
    return %arg0, %c0_i32 : i32, i32
  }
  func.func @transform_2(%arg0: i32) -> (i32, i32) {
    %c0_i32 = arith.constant 0 : i32
    %c0_i32_0 = arith.constant 0 : i32
    return %arg0, %c0_i32 : i32, i32
  }
  func.func @transform_3(%arg0: i32) -> (i32, i32) {
    %c0_i32 = arith.constant 0 : i32
    %c0_i32_0 = arith.constant 0 : i32
    %c0_i32_1 = arith.constant 0 : i32
    return %c0_i32, %c0_i32_0 : i32, i32
  }
  func.func @transform_4(%arg0: i32) -> (i32, i32) {
    %c0_i32 = arith.constant 0 : i32
    %c0_i32_0 = arith.constant 0 : i32
    %c0_i32_1 = arith.constant 0 : i32
    return %c0_i32, %c0_i32_0 : i32, i32
  }
  func.func @transform_5(%arg0: i32) -> (i32, i32) {
    %c0_i32 = arith.constant 0 : i32
    %c0_i32_0 = arith.constant 0 : i32
    %c0_i32_1 = arith.constant 0 : i32
    return %c0_i32, %c0_i32_0 : i32, i32
  }
  func.func @transform_6(%arg0: i32) -> (i32, i32) {
    %c0_i32 = arith.constant 0 : i32
    %c0_i32_0 = arith.constant 0 : i32
    %c0_i32_1 = arith.constant 0 : i32
    return %c0_i32, %c0_i32_0 : i32, i32
  }
  func.func @transform_7(%arg0: i32) -> (i32, i32) {
    %c0_i32 = arith.constant 0 : i32
    %c0_i32_0 = arith.constant 0 : i32
    %c0_i32_1 = arith.constant 0 : i32
    return %c0_i32, %c0_i32_0 : i32, i32
  }
  func.func @transform_8(%arg0: i32) -> (i32, i32) {
    %c0_i32 = arith.constant 0 : i32
    %c0_i32_0 = arith.constant 0 : i32
    return %arg0, %c0_i32 : i32, i32
  }
}

</mosaic_0001>

<llo_original>
// kernel: tpu_custom_call.1
$region0: #{tpu_custom_call.1}
  #allocation0 [shape = 'u32[]', space=smem, size = 0x4, offset = 0x4, fixed_abs, tag = 'smem constant byte address 0x4 - core index']
  #allocation1 [shape = 'u32[72,128]{1,0:T(1,128)}', space=vmem, size = 0x9000, scoped, tag = 'internal scratch']
  %s0 = inlined_call_operand.vmem [shape: bf16[128,64], index: 0, kind: input, shape index: {}]
  %s1 = inlined_call_operand.vmem [shape: bf16[64,128], index: 1, kind: input, shape index: {}]
  %s2 = inlined_call_operand.vmem [shape: bf16[128,128], index: 2, kind: input, shape index: {}]
  %s3 = inlined_call_operand.hbm [shape: bf16[128,128], index: 3, kind: input, shape index: {}]
  %s4 = inlined_call_operand.hbm [shape: bf16[128,128], index: 4, kind: input, shape index: {}]
  %s5 = inlined_call_operand.vmem [shape: f32[1,128], index: 5, kind: input, shape index: {}]
  %s6 = inlined_call_operand.hbm [shape: bf16[128,128], index: 6, kind: input, shape index: {}]
  %s7 = inlined_call_operand.vmem [shape: f32[1,128], index: 7, kind: input, shape index: {}]
  %s8 = inlined_call_operand.hbm [shape: f32[128,128], index: 8, kind: output, shape index: {}]
  %s9 = sld [smem:[#allocation0]]
  $region54: #{tpu_custom_call.1} parent=0
    _
  %s11 = ssub.s32 1, %s9
  %s12 = scalar_select 0, %s11, %s9
  $region1: #{tpu_custom_call.1} parent=0
    #allocation2 [shape = 'u8[32768]{0}', space=vmem, size = 0x8000, scoped, tag = 'input window, operand 3, single buffered']
    #allocation3 [shape = 's32[1]{0}', space=sflag, size = 0x4, scoped, tag = 'scoped memory for tpu_custom_call.1']
    #allocation4 [shape = 's32[1]{0}', space=sflag, size = 0x4, scoped, tag = 'scoped memory for tpu_custom_call.1']
    #allocation5 [shape = 'u8[32768]{0}', space=vmem, size = 0x8000, scoped, tag = 'input window, operand 4, single buffered']
    #allocation6 [shape = 's32[1]{0}', space=sflag, size = 0x4, scoped, tag = 'scoped memory for tpu_custom_call.1']
    #allocation7 [shape = 'u8[32768]{0}', space=vmem, size = 0x8000, scoped, tag = 'input window, operand 6, single buffered']
    #allocation8 [shape = 'u8[65536]{0}', space=vmem, size = 0x10000, scoped, tag = 'output window, operand 0, single buffered']
    %13 = vsyncpa [#allocation3], 0
    %14 = vsyncpa [#allocation6], 0
    %15 = vsyncpa [#allocation4], 0
    // Predicated region
    $region2: #{tpu_custom_call.1} parent=1 // pred_check
      _
    $region3: #{tpu_custom_call.1} parent=1 // pred_check_branch
      %17 = sbr.rel (0) target = $region5
    $region4: #{tpu_custom_call.1} parent=1 // pred_region
      _
    $region5: #{tpu_custom_call.1} parent=1 // pred_fallthru
      _
    // Predicated region
    $region6: #{tpu_custom_call.1} parent=1 // pred_check
      _
    $region7: #{tpu_custom_call.1} parent=1 // pred_check_branch
      %19 = sbr.rel (0) target = $region9
    $region8: #{tpu_custom_call.1} parent=1 // pred_region
      _
    $region9: #{tpu_custom_call.1} parent=1 // pred_fallthru
      _
    // Predicated region
    $region10: #{tpu_custom_call.1} parent=1 // pred_check
      _
    $region11: #{tpu_custom_call.1} parent=1 // pred_check_branch
      %21 = sbr.rel (0) target = $region13
    $region12: #{tpu_custom_call.1} parent=1 // pred_region
      _
    $region13: #{tpu_custom_call.1} parent=1 // pred_fallthru
      _
    // Predicated region
    $region14: #{tpu_custom_call.1} parent=1 // pred_check
      _
    $region15: #{tpu_custom_call.1} parent=1 // pred_check_branch
      %23 = sbr.rel (0) target = $region17
    $region16: #{tpu_custom_call.1} parent=1 // pred_region
      %25 = vsyncadd [#allocation3], 0
      %s26 = sshll.u32 %s3, 4
      %s27 = int_to_ptr.hbm [resolvable:$true] %s26
      %s28 = sshll.u32 [#allocation2], 4
      %s29 = int_to_ptr.vmem [resolvable:$true] %s28
      %34 = dma.hbm_to_vmem [thread:$0]  %s27, 1024, %s29, [#allocation3], 64, 64, 4
    $region17: #{tpu_custom_call.1} parent=1 // pred_fallthru
      _
    // Predicated region
    $region18: #{tpu_custom_call.1} parent=1 // pred_check
      _
    $region19: #{tpu_custom_call.1} parent=1 // pred_check_branch
      %36 = sbr.rel (0) target = $region21
    $region20: #{tpu_custom_call.1} parent=1 // pred_region
      %38 = vsyncadd [#allocation6], 0
      %s39 = sshll.u32 %s4, 4
      %s40 = int_to_ptr.hbm [resolvable:$true] %s39
      %s41 = sshll.u32 [#allocation5], 4
      %s42 = int_to_ptr.vmem [resolvable:$true] %s41
      %47 = dma.hbm_to_vmem [thread:$0]  %s40, 1024, %s42, [#allocation6], 64, 64, 4
    $region21: #{tpu_custom_call.1} parent=1 // pred_fallthru
      _
    // Predicated region
    $region22: #{tpu_custom_call.1} parent=1 // pred_check
      _
    $region23: #{tpu_custom_call.1} parent=1 // pred_check_branch
      %49 = sbr.rel (0) target = $region25
    $region24: #{tpu_custom_call.1} parent=1 // pred_region
      _
    $region25: #{tpu_custom_call.1} parent=1 // pred_fallthru
      _
    // Predicated region
    $region26: #{tpu_custom_call.1} parent=1 // pred_check
      _
    $region27: #{tpu_custom_call.1} parent=1 // pred_check_branch
      %51 = sbr.rel (0) target = $region29
    $region28: #{tpu_custom_call.1} parent=1 // pred_region
      %53 = vsyncadd [#allocation6], 0
      %s54 = sshll.u32 %s6, 4
      %s55 = int_to_ptr.hbm [resolvable:$true] %s54
      %s56 = sshll.u32 [#allocation7], 4
      %s57 = int_to_ptr.vmem [resolvable:$true] %s56
      %62 = dma.hbm_to_vmem [thread:$0]  %s55, 1024, %s57, [#allocation6], 64, 64, 4
    $region29: #{tpu_custom_call.1} parent=1 // pred_fallthru
      _
    // Predicated region
    $region30: #{tpu_custom_call.1} parent=1 // pred_check
      _
    $region31: #{tpu_custom_call.1} parent=1 // pred_check_branch
      %64 = sbr.rel (0) target = $region33
    $region32: #{tpu_custom_call.1} parent=1 // pred_region
      _
    $region33: #{tpu_custom_call.1} parent=1 // pred_fallthru
      _
    // Predicated region
    $region34: #{tpu_custom_call.1} parent=1 // pred_check
      _
    $region35: #{tpu_custom_call.1} parent=1 // pred_check_branch
      %66 = sbr.rel (0) target = $region37
    $region36: #{tpu_custom_call.1} parent=1 // pred_region
      %68 = dma.done [#allocation3], 1024
    $region37: #{tpu_custom_call.1} parent=1 // pred_fallthru
      _
    // Predicated region
    $region38: #{tpu_custom_call.1} parent=1 // pred_check
      _
    $region39: #{tpu_custom_call.1} parent=1 // pred_check_branch
      %70 = sbr.rel (0) target = $region41
    $region40: #{tpu_custom_call.1} parent=1 // pred_region
      %72 = dma.done [#allocation6], 1024
    $region41: #{tpu_custom_call.1} parent=1 // pred_fallthru
      _
    // Predicated region
    $region42: #{tpu_custom_call.1} parent=1 // pred_check
      _
    $region43: #{tpu_custom_call.1} parent=1 // pred_check_branch
      %74 = sbr.rel (0) target = $region45
    $region44: #{tpu_custom_call.1} parent=1 // pred_region
      %76 = dma.done [#allocation6], 1024
    $region45: #{tpu_custom_call.1} parent=1 // pred_fallthru
      _
    %v78 = vld [vmem:[%s1] sm:$0xf]
    %v79 = vld [vmem:[%s1 + $0x4] sm:$0xf]
    %v80 = vld [vmem:[%s1 + $0x8] sm:$0xf]
    %v81 = vld [vmem:[%s1 + $0xc] sm:$0xf]
    %v82 = vld [vmem:[%s1 + $0x10] sm:$0xf]
    %v83 = vld [vmem:[%s1 + $0x14] sm:$0xf]
    %v84 = vld [vmem:[%s1 + $0x18] sm:$0xf]
    %v85 = vld [vmem:[%s1 + $0x1c] sm:$0xf]
    %v86 = vld [vmem:[#allocation5] sm:$0xf]
    %v87 = vld [vmem:[#allocation5 + $0x4] sm:$0xf]
    %v88 = vld [vmem:[#allocation5 + $0x8] sm:$0xf]
    %v89 = vld [vmem:[#allocation5 + $0xc] sm:$0xf]
    %v90 = vld [vmem:[#allocation5 + $0x10] sm:$0xf]
    %v91 = vld [vmem:[#allocation5 + $0x14] sm:$0xf]
    %v92 = vld [vmem:[#allocation5 + $0x18] sm:$0xf]
    %v93 = vld [vmem:[#allocation5 + $0x1c] sm:$0xf]
    %v94 = vld [vmem:[#allocation5 + $0x20] sm:$0xf]
    %v95 = vld [vmem:[#allocation5 + $0x24] sm:$0xf]
    %v96 = vld [vmem:[#allocation5 + $0x28] sm:$0xf]
    %v97 = vld [vmem:[#allocation5 + $0x2c] sm:$0xf]
    %v98 = vld [vmem:[#allocation5 + $0x30] sm:$0xf]
    %v99 = vld [vmem:[#allocation5 + $0x34] sm:$0xf]
    %v100 = vld [vmem:[#allocation5 + $0x38] sm:$0xf]
    %v101 = vld [vmem:[#allocation5 + $0x3c] sm:$0xf]
    %v110 = vunpack.c.l.b16 %v78
    %v111 = vunpack.c.l.b16 %v79
    %v112 = vunpack.c.l.b16 %v80
    %v113 = vunpack.c.l.b16 %v81
    %v114 = vunpack.c.l.b16 %v82
    %v115 = vunpack.c.l.b16 %v83
    %v116 = vunpack.c.l.b16 %v84
    %v117 = vunpack.c.l.b16 %v85
    %v118 = vpack.c.b16 %v111, %v110
    %v119 = vpack.c.b16 %v113, %v112
    %v120 = vpack.c.b16 %v115, %v114
    %v121 = vpack.c.b16 %v117, %v116
    %v142 = vunpack.c.l.b16 %v86
    %v143 = vunpack.c.l.b16 %v87
    %v144 = vunpack.c.l.b16 %v88
    %v145 = vunpack.c.l.b16 %v89
    %v146 = vunpack.c.l.b16 %v90
    %v147 = vunpack.c.l.b16 %v91
    %v148 = vunpack.c.l.b16 %v92
    %v149 = vunpack.c.l.b16 %v93
    %v150 = vunpack.c.l.b16 %v94
    %v151 = vunpack.c.l.b16 %v95
    %v152 = vunpack.c.l.b16 %v96
    %v153 = vunpack.c.l.b16 %v97
    %v154 = vunpack.c.l.b16 %v98
    %v155 = vunpack.c.l.b16 %v99
    %v156 = vunpack.c.l.b16 %v100
    %v157 = vunpack.c.l.b16 %v101
    %v158 = vpack.c.b16 %v143, %v142
    %v159 = vpack.c.b16 %v145, %v144
    %v160 = vpack.c.b16 %v147, %v146
    %v161 = vpack.c.b16 %v149, %v148
    %v162 = vpack.c.b16 %v151, %v150
    %v163 = vpack.c.b16 %v153, %v152
    %v164 = vpack.c.b16 %v155, %v154
    %v165 = vpack.c.b16 %v157, %v156
    %174 = vmatpush.bf16.msra.mxu0 %v165
    %175 = vmatpush.bf16.msra.mxu0 %v164
    %176 = vmatpush.bf16.msra.mxu0 %v163
    %177 = vmatpush.bf16.msra.mxu0 %v162
    %178 = vmatpush.bf16.msra.mxu0 %v161
    %179 = vmatpush.bf16.msra.mxu0 %v160
    %180 = vmatpush.bf16.msra.mxu0 %v159
    %181 = vmatpush.bf16.msra.mxu0 %v158
    %182 = vmatmul.bf16.gmra.mxu0 %v118
    %v183 = vpop.f32.mrf.mxu0
    %v184 = vadd.f32 0.0, %v183
    %v185 = vpop.f32.mrf.mxu0
    %v186 = vadd.f32 0.0, %v185
    %187 = vmatmul.bf16.gmra.mxu0 %v119
    %v188 = vpop.f32.mrf.mxu0
    %v189 = vadd.f32 0.0, %v188
    %v190 = vpop.f32.mrf.mxu0
    %v191 = vadd.f32 0.0, %v190
    %192 = vmatmul.bf16.gmra.mxu0 %v120
    %v193 = vpop.f32.mrf.mxu0
    %v194 = vadd.f32 0.0, %v193
    %v195 = vpop.f32.mrf.mxu0
    %v196 = vadd.f32 0.0, %v195
    %197 = vmatmul.bf16.gmra.mxu0 %v121
    %v198 = vpop.f32.mrf.mxu0
    %v199 = vadd.f32 0.0, %v198
    %v200 = vpop.f32.mrf.mxu0
    %v201 = vadd.f32 0.0, %v200
    %202 = vdwg.mxu0
    %v203 = vld [vmem:[%s2] sm:$0xf]
    %v204 = vld [vmem:[%s2 + $0x4] sm:$0xf]
    %v205 = vld [vmem:[%s2 + $0x8] sm:$0xf]
    %v206 = vld [vmem:[%s2 + $0xc] sm:$0xf]
    %v207 = vld [vmem:[%s2 + $0x10] sm:$0xf]
    %v208 = vld [vmem:[%s2 + $0x14] sm:$0xf]
    %v209 = vld [vmem:[%s2 + $0x18] sm:$0xf]
    %v210 = vld [vmem:[%s2 + $0x1c] sm:$0xf]
    %v211 = vld [vmem:[%s2 + $0x20] sm:$0xf]
    %v212 = vld [vmem:[%s2 + $0x24] sm:$0xf]
    %v213 = vld [vmem:[%s2 + $0x28] sm:$0xf]
    %v214 = vld [vmem:[%s2 + $0x2c] sm:$0xf]
    %v215 = vld [vmem:[%s2 + $0x30] sm:$0xf]
    %v216 = vld [vmem:[%s2 + $0x34] sm:$0xf]
    %v217 = vld [vmem:[%s2 + $0x38] sm:$0xf]
    %v218 = vld [vmem:[%s2 + $0x3c] sm:$0xf]
    %v219 = vld [vmem:[#allocation2] sm:$0xf]
    %v220 = vld [vmem:[#allocation2 + $0x4] sm:$0xf]
    %v221 = vld [vmem:[#allocation2 + $0x8] sm:$0xf]
    %v222 = vld [vmem:[#allocation2 + $0xc] sm:$0xf]
    %v223 = vld [vmem:[#allocation2 + $0x10] sm:$0xf]
    %v224 = vld [vmem:[#allocation2 + $0x14] sm:$0xf]
    %v225 = vld [vmem:[#allocation2 + $0x18] sm:$0xf]
    %v226 = vld [vmem:[#allocation2 + $0x1c] sm:$0xf]
    %v227 = vld [vmem:[#allocation2 + $0x20] sm:$0xf]
    %v228 = vld [vmem:[#allocation2 + $0x24] sm:$0xf]
    %v229 = vld [vmem:[#allocation2 + $0x28] sm:$0xf]
    %v230 = vld [vmem:[#allocation2 + $0x2c] sm:$0xf]
    %v231 = vld [vmem:[#allocation2 + $0x30] sm:$0xf]
    %v232 = vld [vmem:[#allocation2 + $0x34] sm:$0xf]
    %v233 = vld [vmem:[#allocation2 + $0x38] sm:$0xf]
    %v234 = vld [vmem:[#allocation2 + $0x3c] sm:$0xf]
    %v235 = vld [vmem:[%s0] sm:$0xf]
    %v236 = vld [vmem:[%s0 + $0x4] sm:$0xf]
    %v237 = vld [vmem:[%s0 + $0x8] sm:$0xf]
    %v238 = vld [vmem:[%s0 + $0xc] sm:$0xf]
    %v239 = vld [vmem:[%s0 + $0x10] sm:$0xf]
    %v240 = vld [vmem:[%s0 + $0x14] sm:$0xf]
    %v241 = vld [vmem:[%s0 + $0x18] sm:$0xf]
    %v242 = vld [vmem:[%s0 + $0x1c] sm:$0xf]
    %v243 = vld [vmem:[%s0 + $0x20] sm:$0xf]
    %v244 = vld [vmem:[%s0 + $0x24] sm:$0xf]
    %v245 = vld [vmem:[%s0 + $0x28] sm:$0xf]
    %v246 = vld [vmem:[%s0 + $0x2c] sm:$0xf]
    %v247 = vld [vmem:[%s0 + $0x30] sm:$0xf]
    %v248 = vld [vmem:[%s0 + $0x34] sm:$0xf]
    %v249 = vld [vmem:[%s0 + $0x38] sm:$0xf]
    %v250 = vld [vmem:[%s0 + $0x3c] sm:$0xf]
    %v251 = vpack.c.bf16 %v186, %v184
    %v252 = vpack.c.bf16 %v191, %v189
    %v253 = vpack.c.bf16 %v196, %v194
    %v254 = vpack.c.bf16 %v201, %v199
    %v271 = vunpack.c.l.b16 %v235
    %v272 = vunpack.c.l.b16 %v236
    %v273 = vunpack.c.l.b16 %v237
    %v274 = vunpack.c.l.b16 %v238
    %v275 = vunpack.c.l.b16 %v239
    %v276 = vunpack.c.l.b16 %v240
    %v277 = vunpack.c.l.b16 %v241
    %v278 = vunpack.c.l.b16 %v242
    %v279 = vunpack.c.l.b16 %v243
    %v280 = vunpack.c.l.b16 %v244
    %v281 = vunpack.c.l.b16 %v245
    %v282 = vunpack.c.l.b16 %v246
    %v283 = vunpack.c.l.b16 %v247
    %v284 = vunpack.c.l.b16 %v248
    %v285 = vunpack.c.l.b16 %v249
    %v286 = vunpack.c.l.b16 %v250
    %v287 = vpack.c.b16 %v272, %v271
    %v288 = vpack.c.b16 %v274, %v273
    %v289 = vpack.c.b16 %v276, %v275
    %v290 = vpack.c.b16 %v278, %v277
    %v291 = vpack.c.b16 %v280, %v279
    %v292 = vpack.c.b16 %v282, %v281
    %v293 = vpack.c.b16 %v284, %v283
    %v294 = vpack.c.b16 %v286, %v285
    %vm295 = vcmask 523264
    %v297 = vsel %vm295, %v287, 0
    %v300 = vsel %vm295, %v288, 0
    %v303 = vsel %vm295, %v289, 0
    %v306 = vsel %vm295, %v290, 0
    %v309 = vsel %vm295, %v291, 0
    %v312 = vsel %vm295, %v292, 0
    %v315 = vsel %vm295, %v293, 0
    %v318 = vsel %vm295, %v294, 0
    %320 = vmatpush.bf16.msra.mxu0 0
    %321 = vmatpush.bf16.msra.mxu0 0
    %322 = vmatpush.bf16.msra.mxu0 0
    %323 = vmatpush.bf16.msra.mxu0 0
    %324 = vmatpush.bf16.msra.mxu0 %v254
    %325 = vmatpush.bf16.msra.mxu0 %v253
    %326 = vmatpush.bf16.msra.mxu0 %v252
    %327 = vmatpush.bf16.msra.mxu0 %v251
    %328 = vmatmul.bf16.gmra.mxu0 %v297
    %v329 = vpop.f32.mrf.mxu0
    %v330 = vadd.f32 0.0, %v329
    %v331 = vpop.f32.mrf.mxu0
    %v332 = vadd.f32 0.0, %v331
    %333 = vmatmul.bf16.gmra.mxu0 %v300
    %v334 = vpop.f32.mrf.mxu0
    %v335 = vadd.f32 0.0, %v334
    %v336 = vpop.f32.mrf.mxu0
    %v337 = vadd.f32 0.0, %v336
    %338 = vmatmul.bf16.gmra.mxu0 %v303
    %v339 = vpop.f32.mrf.mxu0
    %v340 = vadd.f32 0.0, %v339
    %v341 = vpop.f32.mrf.mxu0
    %v342 = vadd.f32 0.0, %v341
    %343 = vmatmul.bf16.gmra.mxu0 %v306
    %v344 = vpop.f32.mrf.mxu0
    %v345 = vadd.f32 0.0, %v344
    %v346 = vpop.f32.mrf.mxu0
    %v347 = vadd.f32 0.0, %v346
    %348 = vmatmul.bf16.gmra.mxu0 %v309
    %v349 = vpop.f32.mrf.mxu0
    %v350 = vadd.f32 0.0, %v349
    %v351 = vpop.f32.mrf.mxu0
    %v352 = vadd.f32 0.0, %v351
    %353 = vmatmul.bf16.gmra.mxu0 %v312
    %v354 = vpop.f32.mrf.mxu0
    %v355 = vadd.f32 0.0, %v354
    %v356 = vpop.f32.mrf.mxu0
    %v357 = vadd.f32 0.0, %v356
    %358 = vmatmul.bf16.gmra.mxu0 %v315
    %v359 = vpop.f32.mrf.mxu0
    %v360 = vadd.f32 0.0, %v359
    %v361 = vpop.f32.mrf.mxu0
    %v362 = vadd.f32 0.0, %v361
    %363 = vmatmul.bf16.gmra.mxu0 %v318
    %v364 = vpop.f32.mrf.mxu0
    %v365 = vadd.f32 0.0, %v364
    %v366 = vpop.f32.mrf.mxu0
    %v367 = vadd.f32 0.0, %v366
    %368 = vdwg.mxu0
    %v385 = vunpack.c.l.b16 %v203
    %v386 = vunpack.c.l.b16 %v204
    %v387 = vunpack.c.l.b16 %v205
    %v388 = vunpack.c.l.b16 %v206
    %v389 = vunpack.c.l.b16 %v207
    %v390 = vunpack.c.l.b16 %v208
    %v391 = vunpack.c.l.b16 %v209
    %v392 = vunpack.c.l.b16 %v210
    %v393 = vunpack.c.l.b16 %v211
    %v394 = vunpack.c.l.b16 %v212
    %v395 = vunpack.c.l.b16 %v213
    %v396 = vunpack.c.l.b16 %v214
    %v397 = vunpack.c.l.b16 %v215
    %v398 = vunpack.c.l.b16 %v216
    %v399 = vunpack.c.l.b16 %v217
    %v400 = vunpack.c.l.b16 %v218
    %v401 = vpack.c.b16 %v386, %v385
    %v402 = vpack.c.b16 %v388, %v387
    %v403 = vpack.c.b16 %v390, %v389
    %v404 = vpack.c.b16 %v392, %v391
    %v405 = vpack.c.b16 %v394, %v393
    %v406 = vpack.c.b16 %v396, %v395
    %v407 = vpack.c.b16 %v398, %v397
    %v408 = vpack.c.b16 %v400, %v399
    %v433 = vunpack.c.l.b16 %v219
    %v434 = vunpack.c.l.b16 %v220
    %v435 = vunpack.c.l.b16 %v221
    %v436 = vunpack.c.l.b16 %v222
    %v437 = vunpack.c.l.b16 %v223
    %v438 = vunpack.c.l.b16 %v224
    %v439 = vunpack.c.l.b16 %v225
    %v440 = vunpack.c.l.b16 %v226
    %v441 = vunpack.c.l.b16 %v227
    %v442 = vunpack.c.l.b16 %v228
    %v443 = vunpack.c.l.b16 %v229
    %v444 = vunpack.c.l.b16 %v230
    %v445 = vunpack.c.l.b16 %v231
    %v446 = vunpack.c.l.b16 %v232
    %v447 = vunpack.c.l.b16 %v233
    %v448 = vunpack.c.l.b16 %v234
    %v449 = vpack.c.b16 %v434, %v433
    %v450 = vpack.c.b16 %v436, %v435
    %v451 = vpack.c.b16 %v438, %v437
    %v452 = vpack.c.b16 %v440, %v439
    %v453 = vpack.c.b16 %v442, %v441
    %v454 = vpack.c.b16 %v444, %v443
    %v455 = vpack.c.b16 %v446, %v445
    %v456 = vpack.c.b16 %v448, %v447
    %465 = vmatpush.bf16.msra.mxu0 %v456
    %466 = vmatpush.bf16.msra.mxu0 %v455
    %467 = vmatpush.bf16.msra.mxu0 %v454
    %468 = vmatpush.bf16.msra.mxu0 %v453
    %469 = vmatpush.bf16.msra.mxu0 %v452
    %470 = vmatpush.bf16.msra.mxu0 %v451
    %471 = vmatpush.bf16.msra.mxu0 %v450
    %472 = vmatpush.bf16.msra.mxu0 %v449
    %473 = vmatmul.bf16.gmra.mxu0 %v401
    %v474 = vpop.f32.mrf.mxu0
    %v475 = vadd.f32 %v330, %v474
    %v476 = vpop.f32.mrf.mxu0
    %v477 = vadd.f32 %v332, %v476
    %478 = vmatmul.bf16.gmra.mxu0 %v402
    %v479 = vpop.f32.mrf.mxu0
    %v480 = vadd.f32 %v335, %v479
    %v481 = vpop.f32.mrf.mxu0
    %v482 = vadd.f32 %v337, %v481
    %483 = vmatmul.bf16.gmra.mxu0 %v403
    %v484 = vpop.f32.mrf.mxu0
    %v485 = vadd.f32 %v340, %v484
    %v486 = vpop.f32.mrf.mxu0
    %v487 = vadd.f32 %v342, %v486
    %488 = vmatmul.bf16.gmra.mxu0 %v404
    %v489 = vpop.f32.mrf.mxu0
    %v490 = vadd.f32 %v345, %v489
    %v491 = vpop.f32.mrf.mxu0
    %v492 = vadd.f32 %v347, %v491
    %493 = vmatmul.bf16.gmra.mxu0 %v405
    %v494 = vpop.f32.mrf.mxu0
    %v495 = vadd.f32 %v350, %v494
    %v496 = vpop.f32.mrf.mxu0
    %v497 = vadd.f32 %v352, %v496
    %498 = vmatmul.bf16.gmra.mxu0 %v406
    %v499 = vpop.f32.mrf.mxu0
    %v500 = vadd.f32 %v355, %v499
    %v501 = vpop.f32.mrf.mxu0
    %v502 = vadd.f32 %v357, %v501
    %503 = vmatmul.bf16.gmra.mxu0 %v407
    %v504 = vpop.f32.mrf.mxu0
    %v505 = vadd.f32 %v360, %v504
    %v506 = vpop.f32.mrf.mxu0
    %v507 = vadd.f32 %v362, %v506
    %508 = vmatmul.bf16.gmra.mxu0 %v408
    %v509 = vpop.f32.mrf.mxu0
    %v510 = vadd.f32 %v365, %v509
    %v511 = vpop.f32.mrf.mxu0
    %v512 = vadd.f32 %v367, %v511
    %513 = vdwg.mxu0
    %v514 = vld [vmem:[%s5] sm:$0x1]
    %v516 = vperm.slane %v514, 0
    %v518 = vadd.f32 %v475, %v516
    %v519 = vadd.f32 %v477, %v516
    %v520 = vadd.f32 %v480, %v516
    %v521 = vadd.f32 %v482, %v516
    %v522 = vadd.f32 %v485, %v516
    %v523 = vadd.f32 %v487, %v516
    %v524 = vadd.f32 %v490, %v516
    %v525 = vadd.f32 %v492, %v516
    %v526 = vadd.f32 %v495, %v516
    %v527 = vadd.f32 %v497, %v516
    %v528 = vadd.f32 %v500, %v516
    %v529 = vadd.f32 %v502, %v516
    %v530 = vadd.f32 %v505, %v516
    %v531 = vadd.f32 %v507, %v516
    %v532 = vadd.f32 %v510, %v516
    %v533 = vadd.f32 %v512, %v516
    %v534 = vmax.f32 %v518, 0.0
    %v535 = vmax.f32 %v519, 0.0
    %v536 = vmax.f32 %v520, 0.0
    %v537 = vmax.f32 %v521, 0.0
    %v538 = vmax.f32 %v522, 0.0
    %v539 = vmax.f32 %v523, 0.0
    %v540 = vmax.f32 %v524, 0.0
    %v541 = vmax.f32 %v525, 0.0
    %v542 = vmax.f32 %v526, 0.0
    %v543 = vmax.f32 %v527, 0.0
    %v544 = vmax.f32 %v528, 0.0
    %v545 = vmax.f32 %v529, 0.0
    %v546 = vmax.f32 %v530, 0.0
    %v547 = vmax.f32 %v531, 0.0
    %v548 = vmax.f32 %v532, 0.0
    %v549 = vmax.f32 %v533, 0.0
    %v550 = vpack.c.bf16 %v535, %v534
    %v551 = vpack.c.bf16 %v537, %v536
    %v552 = vpack.c.bf16 %v539, %v538
    %v553 = vpack.c.bf16 %v541, %v540
    %v554 = vpack.c.bf16 %v543, %v542
    %v555 = vpack.c.bf16 %v545, %v544
    %v556 = vpack.c.bf16 %v547, %v546
    %v557 = vpack.c.bf16 %v549, %v548
    %v558 = vld [vmem:[#allocation7] sm:$0xf]
    %v559 = vld [vmem:[#allocation7 + $0x4] sm:$0xf]
    %v560 = vld [vmem:[#allocation7 + $0x8] sm:$0xf]
    %v561 = vld [vmem:[#allocation7 + $0xc] sm:$0xf]
    %v562 = vld [vmem:[#allocation7 + $0x10] sm:$0xf]
    %v563 = vld [vmem:[#allocation7 + $0x14] sm:$0xf]
    %v564 = vld [vmem:[#allocation7 + $0x18] sm:$0xf]
    %v565 = vld [vmem:[#allocation7 + $0x1c] sm:$0xf]
    %v566 = vld [vmem:[#allocation7 + $0x20] sm:$0xf]
    %v567 = vld [vmem:[#allocation7 + $0x24] sm:$0xf]
    %v568 = vld [vmem:[#allocation7 + $0x28] sm:$0xf]
    %v569 = vld [vmem:[#allocation7 + $0x2c] sm:$0xf]
    %v570 = vld [vmem:[#allocation7 + $0x30] sm:$0xf]
    %v571 = vld [vmem:[#allocation7 + $0x34] sm:$0xf]
    %v572 = vld [vmem:[#allocation7 + $0x38] sm:$0xf]
    %v573 = vld [vmem:[#allocation7 + $0x3c] sm:$0xf]
    %v574 = vld [vmem:[%s7] sm:$0x1]
    %v576 = vperm.slane %v574, 0
    %v594 = vunpack.c.l.b16 %v558
    %v595 = vunpack.c.l.b16 %v559
    %v596 = vunpack.c.l.b16 %v560
    %v597 = vunpack.c.l.b16 %v561
    %v598 = vunpack.c.l.b16 %v562
    %v599 = vunpack.c.l.b16 %v563
    %v600 = vunpack.c.l.b16 %v564
    %v601 = vunpack.c.l.b16 %v565
    %v602 = vunpack.c.l.b16 %v566
    %v603 = vunpack.c.l.b16 %v567
    %v604 = vunpack.c.l.b16 %v568
    %v605 = vunpack.c.l.b16 %v569
    %v606 = vunpack.c.l.b16 %v570
    %v607 = vunpack.c.l.b16 %v571
    %v608 = vunpack.c.l.b16 %v572
    %v609 = vunpack.c.l.b16 %v573
    %v610 = vpack.c.b16 %v595, %v594
    %v611 = vpack.c.b16 %v597, %v596
    %v612 = vpack.c.b16 %v599, %v598
    %v613 = vpack.c.b16 %v601, %v600
    %v614 = vpack.c.b16 %v603, %v602
    %v615 = vpack.c.b16 %v605, %v604
    %v616 = vpack.c.b16 %v607, %v606
    %v617 = vpack.c.b16 %v609, %v608
    %626 = vmatpush.bf16.msra.mxu0 %v617
    %627 = vmatpush.bf16.msra.mxu0 %v616
    %628 = vmatpush.bf16.msra.mxu0 %v615
    %629 = vmatpush.bf16.msra.mxu0 %v614
    %630 = vmatpush.bf16.msra.mxu0 %v613
    %631 = vmatpush.bf16.msra.mxu0 %v612
    %632 = vmatpush.bf16.msra.mxu0 %v611
    %633 = vmatpush.bf16.msra.mxu0 %v610
    %634 = vmatmul.bf16.gmra.mxu0 %v550
    %v635 = vpop.f32.mrf.mxu0
    %v636 = vadd.f32 %v576, %v635
    %v637 = vpop.f32.mrf.mxu0
    %v638 = vadd.f32 %v576, %v637
    %639 = vmatmul.bf16.gmra.mxu0 %v551
    %v640 = vpop.f32.mrf.mxu0
    %v641 = vadd.f32 %v576, %v640
    %v642 = vpop.f32.mrf.mxu0
    %v643 = vadd.f32 %v576, %v642
    %644 = vmatmul.bf16.gmra.mxu0 %v552
    %v645 = vpop.f32.mrf.mxu0
    %v646 = vadd.f32 %v576, %v645
    %v647 = vpop.f32.mrf.mxu0
    %v648 = vadd.f32 %v576, %v647
    %649 = vmatmul.bf16.gmra.mxu0 %v553
    %v650 = vpop.f32.mrf.mxu0
    %v651 = vadd.f32 %v576, %v650
    %v652 = vpop.f32.mrf.mxu0
    %v653 = vadd.f32 %v576, %v652
    %654 = vmatmul.bf16.gmra.mxu0 %v554
    %v655 = vpop.f32.mrf.mxu0
    %v656 = vadd.f32 %v576, %v655
    %v657 = vpop.f32.mrf.mxu0
    %v658 = vadd.f32 %v576, %v657
    %659 = vmatmul.bf16.gmra.mxu0 %v555
    %v660 = vpop.f32.mrf.mxu0
    %v661 = vadd.f32 %v576, %v660
    %v662 = vpop.f32.mrf.mxu0
    %v663 = vadd.f32 %v576, %v662
    %664 = vmatmul.bf16.gmra.mxu0 %v556
    %v665 = vpop.f32.mrf.mxu0
    %v666 = vadd.f32 %v576, %v665
    %v667 = vpop.f32.mrf.mxu0
    %v668 = vadd.f32 %v576, %v667
    %669 = vmatmul.bf16.gmra.mxu0 %v557
    %v670 = vpop.f32.mrf.mxu0
    %v671 = vadd.f32 %v576, %v670
    %v672 = vpop.f32.mrf.mxu0
    %v673 = vadd.f32 %v576, %v672
    %674 = vdwg.mxu0
    %675 = vst [vmem:[#allocation8] sm:$0xff] %v636
    %676 = vst [vmem:[#allocation8 + $0x8] sm:$0xff] %v638
    %677 = vst [vmem:[#allocation8 + $0x10] sm:$0xff] %v641
    %678 = vst [vmem:[#allocation8 + $0x18] sm:$0xff] %v643
    %679 = vst [vmem:[#allocation8 + $0x20] sm:$0xff] %v646
    %680 = vst [vmem:[#allocation8 + $0x28] sm:$0xff] %v648
    %681 = vst [vmem:[#allocation8 + $0x30] sm:$0xff] %v651
    %682 = vst [vmem:[#allocation8 + $0x38] sm:$0xff] %v653
    %683 = vst [vmem:[#allocation8 + $0x40] sm:$0xff] %v656
    %684 = vst [vmem:[#allocation8 + $0x48] sm:$0xff] %v658
    %685 = vst [vmem:[#allocation8 + $0x50] sm:$0xff] %v661
    %686 = vst [vmem:[#allocation8 + $0x58] sm:$0xff] %v663
    %687 = vst [vmem:[#allocation8 + $0x60] sm:$0xff] %v666
    %688 = vst [vmem:[#allocation8 + $0x68] sm:$0xff] %v668
    %689 = vst [vmem:[#allocation8 + $0x70] sm:$0xff] %v671
    %690 = vst [vmem:[#allocation8 + $0x78] sm:$0xff] %v673
    // Predicated region
    $region46: #{tpu_custom_call.1} parent=1 // pred_check
      _
    $region47: #{tpu_custom_call.1} parent=1 // pred_check_branch
      %692 = sbr.rel (0) target = $region49
    $region48: #{tpu_custom_call.1} parent=1 // pred_region
      %694 = vsyncadd [#allocation4], 0
      %s695 = sshll.u32 [#allocation8], 4
      %s696 = int_to_ptr.vmem [resolvable:$true] %s695
      %s697 = sshll.u32 %s8, 4
      %s698 = int_to_ptr.hbm [resolvable:$true] %s697
      %703 = dma.vmem_to_hbm [thread:$0]  %s696, 2048, %s698, [#allocation4], 128, 128, 8
    $region49: #{tpu_custom_call.1} parent=1 // pred_fallthru
      _
    // Predicated region
    $region50: #{tpu_custom_call.1} parent=1 // pred_check
      _
    $region51: #{tpu_custom_call.1} parent=1 // pred_check_branch
      %705 = sbr.rel (0) target = $region53
    $region52: #{tpu_custom_call.1} parent=1 // pred_region
      %707 = dma.done [#allocation4], 2048
    $region53: #{tpu_custom_call.1} parent=1 // pred_fallthru
      _
    %708 = vsyncpa [#allocation3], 1
    %709 = vsyncpa [#allocation6], 1
    %710 = vsyncpa [#allocation4], 1

// kernel: tpu_custom_call.1
$region0: #{tpu_custom_call.1}
  #allocation0 [shape = 'u32[]', space=smem, size = 0x4, offset = 0x4, fixed_abs, tag = 'smem constant byte address 0x4 - core index']
  #allocation1 [shape = 'u32[72,128]{1,0:T(1,128)}', space=vmem, size = 0x9000, scoped, tag = 'internal scratch']
  %s0 = inlined_call_operand.vmem [shape: bf16[128,64], index: 0, kind: input, shape index: {}]
  %s1 = inlined_call_operand.vmem [shape: bf16[64,128], index: 1, kind: input, shape index: {}]
  %s2 = inlined_call_operand.vmem [shape: bf16[128,128], index: 2, kind: input, shape index: {}]
  %s3 = inlined_call_operand.hbm [shape: bf16[128,128], index: 3, kind: input, shape index: {}]
  %s4 = inlined_call_operand.hbm [shape: bf16[128,128], index: 4, kind: input, shape index: {}]
  %s5 = inlined_call_operand.vmem [shape: f32[1,128], index: 5, kind: input, shape index: {}]
  %s6 = inlined_call_operand.hbm [shape: bf16[128,128], index: 6, kind: input, shape index: {}]
  %s7 = inlined_call_operand.vmem [shape: f32[1,128], index: 7, kind: input, shape index: {}]
  %s8 = inlined_call_operand.hbm [shape: f32[128,128], index: 8, kind: output, shape index: {}]
  %s9 = sld [smem:[#allocation0]]
  $region54: #{tpu_custom_call.1} parent=0
    _
  %s11 = ssub.s32 1, %s9
  %s12 = scalar_select 0, %s11, %s9
  $region1: #{tpu_custom_call.1} parent=0
    #allocation2 [shape = 'u8[32768]{0}', space=vmem, size = 0x8000, scoped, tag = 'input window, operand 3, single buffered']
    #allocation3 [shape = 's32[1]{0}', space=sflag, size = 0x4, scoped, tag = 'scoped memory for tpu_custom_call.1']
    #allocation4 [shape = 's32[1]{0}', space=sflag, size = 0x4, scoped, tag = 'scoped memory for tpu_custom_call.1']
    #allocation5 [shape = 'u8[32768]{0}', space=vmem, size = 0x8000, scoped, tag = 'input window, operand 4, single buffered']
    #allocation6 [shape = 's32[1]{0}', space=sflag, size = 0x4, scoped, tag = 'scoped memory for tpu_custom_call.1']
    #allocation7 [shape = 'u8[32768]{0}', space=vmem, size = 0x8000, scoped, tag = 'input window, operand 6, single buffered']
    #allocation8 [shape = 'u8[65536]{0}', space=vmem, size = 0x10000, scoped, tag = 'output window, operand 0, single buffered']
    %13 = vsyncpa [#allocation3], 0
    %14 = vsyncpa [#allocation6], 0
    %15 = vsyncpa [#allocation4], 0
    // Predicated region
    $region2: #{tpu_custom_call.1} parent=1 // pred_check
      _
    $region3: #{tpu_custom_call.1} parent=1 // pred_check_branch
      %17 = sbr.rel (0) target = $region5
    $region4: #{tpu_custom_call.1} parent=1 // pred_region
      _
    $region5: #{tpu_custom_call.1} parent=1 // pred_fallthru
      _
    // Predicated region
    $region6: #{tpu_custom_call.1} parent=1 // pred_check
      _
    $region7: #{tpu_custom_call.1} parent=1 // pred_check_branch
      %19 = sbr.rel (0) target = $region9
    $region8: #{tpu_custom_call.1} parent=1 // pred_region
      _
    $region9: #{tpu_custom_call.1} parent=1 // pred_fallthru
      _
    // Predicated region
    $region10: #{tpu_custom_call.1} parent=1 // pred_check
      _
    $region11: #{tpu_custom_call.1} parent=1 // pred_check_branch
      %21 = sbr.rel (0) target = $region13
    $region12: #{tpu_custom_call.1} parent=1 // pred_region
      _
    $region13: #{tpu_custom_call.1} parent=1 // pred_fallthru
      _
    // Predicated region
    $region14: #{tpu_custom_call.1} parent=1 // pred_check
      _
    $region15: #{tpu_custom_call.1} parent=1 // pred_check_branch
      %23 = sbr.rel (0) target = $region17
    $region16: #{tpu_custom_call.1} parent=1 // pred_region
      %25 = vsyncadd [#allocation3], 0
      %s26 = sshll.u32 %s3, 4
      %s27 = int_to_ptr.hbm [resolvable:$true] %s26
      %s28 = sshll.u32 [#allocation2], 4
      %s29 = int_to_ptr.vmem [resolvable:$true] %s28
      %34 = dma.hbm_to_vmem [thread:$0]  %s27, 1024, %s29, [#allocation3], 64, 64, 4
    $region17: #{tpu_custom_call.1} parent=1 // pred_fallthru
      _
    // Predicated region
    $region18: #{tpu_custom_call.1} parent=1 // pred_check
      _
    $region19: #{tpu_custom_call.1} parent=1 // pred_check_branch
      %36 = sbr.rel (0) target = $region21
    $region20: #{tpu_custom_call.1} parent=1 // pred_region
      %38 = vsyncadd [#allocation6], 0
      %s39 = sshll.u32 %s4, 4
      %s40 = int_to_ptr.hbm [resolvable:$true] %s39
      %s41 = sshll.u32 [#allocation5], 4
      %s42 = int_to_ptr.vmem [resolvable:$true] %s41
      %47 = dma.hbm_to_vmem [thread:$0]  %s40, 1024, %s42, [#allocation6], 64, 64, 4
    $region21: #{tpu_custom_call.1} parent=1 // pred_fallthru
      _
    // Predicated region
    $region22: #{tpu_custom_call.1} parent=1 // pred_check
      _
    $region23: #{tpu_custom_call.1} parent=1 // pred_check_branch
      %49 = sbr.rel (0) target = $region25
    $region24: #{tpu_custom_call.1} parent=1 // pred_region
      _
    $region25: #{tpu_custom_call.1} parent=1 // pred_fallthru
      _
    // Predicated region
    $region26: #{tpu_custom_call.1} parent=1 // pred_check
      _
    $region27: #{tpu_custom_call.1} parent=1 // pred_check_branch
      %51 = sbr.rel (0) target = $region29
    $region28: #{tpu_custom_call.1} parent=1 // pred_region
      %53 = vsyncadd [#allocation6], 0
      %s54 = sshll.u32 %s6, 4
      %s55 = int_to_ptr.hbm [resolvable:$true] %s54
      %s56 = sshll.u32 [#allocation7], 4
      %s57 = int_to_ptr.vmem [resolvable:$true] %s56
      %62 = dma.hbm_to_vmem [thread:$0]  %s55, 1024, %s57, [#allocation6], 64, 64, 4
    $region29: #{tpu_custom_call.1} parent=1 // pred_fallthru
      _
    // Predicated region
    $region30: #{tpu_custom_call.1} parent=1 // pred_check
      _
    $region31: #{tpu_custom_call.1} parent=1 // pred_check_branch
      %64 = sbr.rel (0) target = $region33
    $region32: #{tpu_custom_call.1} parent=1 // pred_region
      _
    $region33: #{tpu_custom_call.1} parent=1 // pred_fallthru
      _
    // Predicated region
    $region34: #{tpu_custom_call.1} parent=1 // pred_check
      _
    $region35: #{tpu_custom_call.1} parent=1 // pred_check_branch
      %66 = sbr.rel (0) target = $region37
    $region36: #{tpu_custom_call.1} parent=1 // pred_region
      %68 = dma.done [#allocation3], 1024
    $region37: #{tpu_custom_call.1} parent=1 // pred_fallthru
      _
    // Predicated region
    $region38: #{tpu_custom_call.1} parent=1 // pred_check
      _
    $region39: #{tpu_custom_call.1} parent=1 // pred_check_branch
      %70 = sbr.rel (0) target = $region41
    $region40: #{tpu_custom_call.1} parent=1 // pred_region
      %72 = dma.done [#allocation6], 1024
    $region41: #{tpu_custom_call.1} parent=1 // pred_fallthru
      _
    // Predicated region
    $region42: #{tpu_custom_call.1} parent=1 // pred_check
      _
    $region43: #{tpu_custom_call.1} parent=1 // pred_check_branch
      %74 = sbr.rel (0) target = $region45
    $region44: #{tpu_custom_call.1} parent=1 // pred_region
      %76 = dma.done [#allocation6], 1024
    $region45: #{tpu_custom_call.1} parent=1 // pred_fallthru
      _
    %v78 = vld [vmem:[%s1] sm:$0xf]
    %v79 = vld [vmem:[%s1 + $0x4] sm:$0xf]
    %v80 = vld [vmem:[%s1 + $0x8] sm:$0xf]
    %v81 = vld [vmem:[%s1 + $0xc] sm:$0xf]
    %v82 = vld [vmem:[%s1 + $0x10] sm:$0xf]
    %v83 = vld [vmem:[%s1 + $0x14] sm:$0xf]
    %v84 = vld [vmem:[%s1 + $0x18] sm:$0xf]
    %v85 = vld [vmem:[%s1 + $0x1c] sm:$0xf]
    %v86 = vld [vmem:[#allocation5] sm:$0xf]
    %v87 = vld [vmem:[#allocation5 + $0x4] sm:$0xf]
    %v88 = vld [vmem:[#allocation5 + $0x8] sm:$0xf]
    %v89 = vld [vmem:[#allocation5 + $0xc] sm:$0xf]
    %v90 = vld [vmem:[#allocation5 + $0x10] sm:$0xf]
    %v91 = vld [vmem:[#allocation5 + $0x14] sm:$0xf]
    %v92 = vld [vmem:[#allocation5 + $0x18] sm:$0xf]
    %v93 = vld [vmem:[#allocation5 + $0x1c] sm:$0xf]
    %v94 = vld [vmem:[#allocation5 + $0x20] sm:$0xf]
    %v95 = vld [vmem:[#allocation5 + $0x24] sm:$0xf]
    %v96 = vld [vmem:[#allocation5 + $0x28] sm:$0xf]
    %v97 = vld [vmem:[#allocation5 + $0x2c] sm:$0xf]
    %v98 = vld [vmem:[#allocation5 + $0x30] sm:$0xf]
    %v99 = vld [vmem:[#allocation5 + $0x34] sm:$0xf]
    %v100 = vld [vmem:[#allocation5 + $0x38] sm:$0xf]
    %v101 = vld [vmem:[#allocation5 + $0x3c] sm:$0xf]
    %v110 = vunpack.c.l.b16 %v78
    %v111 = vunpack.c.l.b16 %v79
    %v112 = vunpack.c.l.b16 %v80
    %v113 = vunpack.c.l.b16 %v81
    %v114 = vunpack.c.l.b16 %v82
    %v115 = vunpack.c.l.b16 %v83
    %v116 = vunpack.c.l.b16 %v84
    %v117 = vunpack.c.l.b16 %v85
    %v118 = vpack.c.b16 %v111, %v110
    %v119 = vpack.c.b16 %v113, %v112
    %v120 = vpack.c.b16 %v115, %v114
    %v121 = vpack.c.b16 %v117, %v116
    %v142 = vunpack.c.l.b16 %v86
    %v143 = vunpack.c.l.b16 %v87
    %v144 = vunpack.c.l.b16 %v88
    %v145 = vunpack.c.l.b16 %v89
    %v146 = vunpack.c.l.b16 %v90
    %v147 = vunpack.c.l.b16 %v91
    %v148 = vunpack.c.l.b16 %v92
    %v149 = vunpack.c.l.b16 %v93
    %v150 = vunpack.c.l.b16 %v94
    %v151 = vunpack.c.l.b16 %v95
    %v152 = vunpack.c.l.b16 %v96
    %v153 = vunpack.c.l.b16 %v97
    %v154 = vunpack.c.l.b16 %v98
    %v155 = vunpack.c.l.b16 %v99
    %v156 = vunpack.c.l.b16 %v100
    %v157 = vunpack.c.l.b16 %v101
    %v158 = vpack.c.b16 %v143, %v142
    %v159 = vpack.c.b16 %v145, %v144
    %v160 = vpack.c.b16 %v147, %v146
    %v161 = vpack.c.b16 %v149, %v148
    %v162 = vpack.c.b16 %v151, %v150
    %v163 = vpack.c.b16 %v153, %v152
    %v164 = vpack.c.b16 %v155, %v154
    %v165 = vpack.c.b16 %v157, %v156
    %174 = vmatpush.bf16.msra.mxu0 %v165
    %175 = vmatpush.bf16.msra.mxu0 %v164
    %176 = vmatpush.bf16.msra.mxu0 %v163
    %177 = vmatpush.bf16.msra.mxu0 %v162
    %178 = vmatpush.bf16.msra.mxu0 %v161
    %179 = vmatpush.bf16.msra.mxu0 %v160
    %180 = vmatpush.bf16.msra.mxu0 %v159
    %181 = vmatpush.bf16.msra.mxu0 %v158
    %182 = vmatmul.bf16.gmra.mxu0 %v118
    %v183 = vpop.f32.mrf.mxu0
    %v184 = vadd.f32 0.0, %v183
    %v185 = vpop.f32.mrf.mxu0
    %v186 = vadd.f32 0.0, %v185
    %187 = vmatmul.bf16.gmra.mxu0 %v119
    %v188 = vpop.f32.mrf.mxu0
    %v189 = vadd.f32 0.0, %v188
    %v190 = vpop.f32.mrf.mxu0
    %v191 = vadd.f32 0.0, %v190
    %192 = vmatmul.bf16.gmra.mxu0 %v120
    %v193 = vpop.f32.mrf.mxu0
    %v194 = vadd.f32 0.0, %v193
    %v195 = vpop.f32.mrf.mxu0
    %v196 = vadd.f32 0.0, %v195
    %197 = vmatmul.bf16.gmra.mxu0 %v121
    %v198 = vpop.f32.mrf.mxu0
    %v199 = vadd.f32 0.0, %v198
    %v200 = vpop.f32.mrf.mxu0
    %v201 = vadd.f32 0.0, %v200
    %202 = vdwg.mxu0
    %v203 = vld [vmem:[%s2] sm:$0xf]
    %v204 = vld [vmem:[%s2 + $0x4] sm:$0xf]
    %v205 = vld [vmem:[%s2 + $0x8] sm:$0xf]
    %v206 = vld [vmem:[%s2 + $0xc] sm:$0xf]
    %v207 = vld [vmem:[%s2 + $0x10] sm:$0xf]
    %v208 = vld [vmem:[%s2 + $0x14] sm:$0xf]
    %v209 = vld [vmem:[%s2 + $0x18] sm:$0xf]
    %v210 = vld [vmem:[%s2 + $0x1c] sm:$0xf]
    %v211 = vld [vmem:[%s2 + $0x20] sm:$0xf]
    %v212 = vld [vmem:[%s2 + $0x24] sm:$0xf]
    %v213 = vld [vmem:[%s2 + $0x28] sm:$0xf]
    %v214 = vld [vmem:[%s2 + $0x2c] sm:$0xf]
    %v215 = vld [vmem:[%s2 + $0x30] sm:$0xf]
    %v216 = vld [vmem:[%s2 + $0x34] sm:$0xf]
    %v217 = vld [vmem:[%s2 + $0x38] sm:$0xf]
    %v218 = vld [vmem:[%s2 + $0x3c] sm:$0xf]
    %v219 = vld [vmem:[#allocation2] sm:$0xf]
    %v220 = vld [vmem:[#allocation2 + $0x4] sm:$0xf]
    %v221 = vld [vmem:[#allocation2 + $0x8] sm:$0xf]
    %v222 = vld [vmem:[#allocation2 + $0xc] sm:$0xf]
    %v223 = vld [vmem:[#allocation2 + $0x10] sm:$0xf]
    %v224 = vld [vmem:[#allocation2 + $0x14] sm:$0xf]
    %v225 = vld [vmem:[#allocation2 + $0x18] sm:$0xf]
    %v226 = vld [vmem:[#allocation2 + $0x1c] sm:$0xf]
    %v227 = vld [vmem:[#allocation2 + $0x20] sm:$0xf]
    %v228 = vld [vmem:[#allocation2 + $0x24] sm:$0xf]
    %v229 = vld [vmem:[#allocation2 + $0x28] sm:$0xf]
    %v230 = vld [vmem:[#allocation2 + $0x2c] sm:$0xf]
    %v231 = vld [vmem:[#allocation2 + $0x30] sm:$0xf]
    %v232 = vld [vmem:[#allocation2 + $0x34] sm:$0xf]
    %v233 = vld [vmem:[#allocation2 + $0x38] sm:$0xf]
    %v234 = vld [vmem:[#allocation2 + $0x3c] sm:$0xf]
    %v235 = vld [vmem:[%s0] sm:$0xf]
    %v236 = vld [vmem:[%s0 + $0x4] sm:$0xf]
    %v237 = vld [vmem:[%s0 + $0x8] sm:$0xf]
    %v238 = vld [vmem:[%s0 + $0xc] sm:$0xf]
    %v239 = vld [vmem:[%s0 + $0x10] sm:$0xf]
    %v240 = vld [vmem:[%s0 + $0x14] sm:$0xf]
    %v241 = vld [vmem:[%s0 + $0x18] sm:$0xf]
    %v242 = vld [vmem:[%s0 + $0x1c] sm:$0xf]
    %v243 = vld [vmem:[%s0 + $0x20] sm:$0xf]
    %v244 = vld [vmem:[%s0 + $0x24] sm:$0xf]
    %v245 = vld [vmem:[%s0 + $0x28] sm:$0xf]
    %v246 = vld [vmem:[%s0 + $0x2c] sm:$0xf]
    %v247 = vld [vmem:[%s0 + $0x30] sm:$0xf]
    %v248 = vld [vmem:[%s0 + $0x34] sm:$0xf]
    %v249 = vld [vmem:[%s0 + $0x38] sm:$0xf]
    %v250 = vld [vmem:[%s0 + $0x3c] sm:$0xf]
    %v251 = vpack.c.bf16 %v186, %v184
    %v252 = vpack.c.bf16 %v191, %v189
    %v253 = vpack.c.bf16 %v196, %v194
    %v254 = vpack.c.bf16 %v201, %v199
    %v271 = vunpack.c.l.b16 %v235
    %v272 = vunpack.c.l.b16 %v236
    %v273 = vunpack.c.l.b16 %v237
    %v274 = vunpack.c.l.b16 %v238
    %v275 = vunpack.c.l.b16 %v239
    %v276 = vunpack.c.l.b16 %v240
    %v277 = vunpack.c.l.b16 %v241
    %v278 = vunpack.c.l.b16 %v242
    %v279 = vunpack.c.l.b16 %v243
    %v280 = vunpack.c.l.b16 %v244
    %v281 = vunpack.c.l.b16 %v245
    %v282 = vunpack.c.l.b16 %v246
    %v283 = vunpack.c.l.b16 %v247
    %v284 = vunpack.c.l.b16 %v248
    %v285 = vunpack.c.l.b16 %v249
    %v286 = vunpack.c.l.b16 %v250
    %v287 = vpack.c.b16 %v272, %v271
    %v288 = vpack.c.b16 %v274, %v273
    %v289 = vpack.c.b16 %v276, %v275
    %v290 = vpack.c.b16 %v278, %v277
    %v291 = vpack.c.b16 %v280, %v279
    %v292 = vpack.c.b16 %v282, %v281
    %v293 = vpack.c.b16 %v284, %v283
    %v294 = vpack.c.b16 %v286, %v285
    %vm295 = vcmask 523264
    %v297 = vsel %vm295, %v287, 0
    %v300 = vsel %vm295, %v288, 0
    %v303 = vsel %vm295, %v289, 0
    %v306 = vsel %vm295, %v290, 0
    %v309 = vsel %vm295, %v291, 0
    %v312 = vsel %vm295, %v292, 0
    %v315 = vsel %vm295, %v293, 0
    %v318 = vsel %vm295, %v294, 0
    %320 = vmatpush.bf16.msra.mxu0 0
    %321 = vmatpush.bf16.msra.mxu0 0
    %322 = vmatpush.bf16.msra.mxu0 0
    %323 = vmatpush.bf16.msra.mxu0 0
    %324 = vmatpush.bf16.msra.mxu0 %v254
    %325 = vmatpush.bf16.msra.mxu0 %v253
    %326 = vmatpush.bf16.msra.mxu0 %v252
    %327 = vmatpush.bf16.msra.mxu0 %v251
    %328 = vmatmul.bf16.gmra.mxu0 %v297
    %v329 = vpop.f32.mrf.mxu0
    %v330 = vadd.f32 0.0, %v329
    %v331 = vpop.f32.mrf.mxu0
    %v332 = vadd.f32 0.0, %v331
    %333 = vmatmul.bf16.gmra.mxu0 %v300
    %v334 = vpop.f32.mrf.mxu0
    %v335 = vadd.f32 0.0, %v334
    %v336 = vpop.f32.mrf.mxu0
    %v337 = vadd.f32 0.0, %v336
    %338 = vmatmul.bf16.gmra.mxu0 %v303
    %v339 = vpop.f32.mrf.mxu0
    %v340 = vadd.f32 0.0, %v339
    %v341 = vpop.f32.mrf.mxu0
    %v342 = vadd.f32 0.0, %v341
    %343 = vmatmul.bf16.gmra.mxu0 %v306
    %v344 = vpop.f32.mrf.mxu0
    %v345 = vadd.f32 0.0, %v344
    %v346 = vpop.f32.mrf.mxu0
    %v347 = vadd.f32 0.0, %v346
    %348 = vmatmul.bf16.gmra.mxu0 %v309
    %v349 = vpop.f32.mrf.mxu0
    %v350 = vadd.f32 0.0, %v349
    %v351 = vpop.f32.mrf.mxu0
    %v352 = vadd.f32 0.0, %v351
    %353 = vmatmul.bf16.gmra.mxu0 %v312
    %v354 = vpop.f32.mrf.mxu0
    %v355 = vadd.f32 0.0, %v354
    %v356 = vpop.f32.mrf.mxu0
    %v357 = vadd.f32 0.0, %v356
    %358 = vmatmul.bf16.gmra.mxu0 %v315
    %v359 = vpop.f32.mrf.mxu0
    %v360 = vadd.f32 0.0, %v359
    %v361 = vpop.f32.mrf.mxu0
    %v362 = vadd.f32 0.0, %v361
    %363 = vmatmul.bf16.gmra.mxu0 %v318
    %v364 = vpop.f32.mrf.mxu0
    %v365 = vadd.f32 0.0, %v364
    %v366 = vpop.f32.mrf.mxu0
    %v367 = vadd.f32 0.0, %v366
    %368 = vdwg.mxu0
    %v385 = vunpack.c.l.b16 %v203
    %v386 = vunpack.c.l.b16 %v204
    %v387 = vunpack.c.l.b16 %v205
    %v388 = vunpack.c.l.b16 %v206
    %v389 = vunpack.c.l.b16 %v207
    %v390 = vunpack.c.l.b16 %v208
    %v391 = vunpack.c.l.b16 %v209
    %v392 = vunpack.c.l.b16 %v210
    %v393 = vunpack.c.l.b16 %v211
    %v394 = vunpack.c.l.b16 %v212
    %v395 = vunpack.c.l.b16 %v213
    %v396 = vunpack.c.l.b16 %v214
    %v397 = vunpack.c.l.b16 %v215
    %v398 = vunpack.c.l.b16 %v216
    %v399 = vunpack.c.l.b16 %v217
    %v400 = vunpack.c.l.b16 %v218
    %v401 = vpack.c.b16 %v386, %v385
    %v402 = vpack.c.b16 %v388, %v387
    %v403 = vpack.c.b16 %v390, %v389
    %v404 = vpack.c.b16 %v392, %v391
    %v405 = vpack.c.b16 %v394, %v393
    %v406 = vpack.c.b16 %v396, %v395
    %v407 = vpack.c.b16 %v398, %v397
    %v408 = vpack.c.b16 %v400, %v399
    %v433 = vunpack.c.l.b16 %v219
    %v434 = vunpack.c.l.b16 %v220
    %v435 = vunpack.c.l.b16 %v221
    %v436 = vunpack.c.l.b16 %v222
    %v437 = vunpack.c.l.b16 %v223
    %v438 = vunpack.c.l.b16 %v224
    %v439 = vunpack.c.l.b16 %v225
    %v440 = vunpack.c.l.b16 %v226
    %v441 = vunpack.c.l.b16 %v227
    %v442 = vunpack.c.l.b16 %v228
    %v443 = vunpack.c.l.b16 %v229
    %v444 = vunpack.c.l.b16 %v230
    %v445 = vunpack.c.l.b16 %v231
    %v446 = vunpack.c.l.b16 %v232
    %v447 = vunpack.c.l.b16 %v233
    %v448 = vunpack.c.l.b16 %v234
    %v449 = vpack.c.b16 %v434, %v433
    %v450 = vpack.c.b16 %v436, %v435
    %v451 = vpack.c.b16 %v438, %v437
    %v452 = vpack.c.b16 %v440, %v439
    %v453 = vpack.c.b16 %v442, %v441
    %v454 = vpack.c.b16 %v444, %v443
    %v455 = vpack.c.b16 %v446, %v445
    %v456 = vpack.c.b16 %v448, %v447
    %465 = vmatpush.bf16.msra.mxu0 %v456
    %466 = vmatpush.bf16.msra.mxu0 %v455
    %467 = vmatpush.bf16.msra.mxu0 %v454
    %468 = vmatpush.bf16.msra.mxu0 %v453
    %469 = vmatpush.bf16.msra.mxu0 %v452
    %470 = vmatpush.bf16.msra.mxu0 %v451
    %471 = vmatpush.bf16.msra.mxu0 %v450
    %472 = vmatpush.bf16.msra.mxu0 %v449
    %473 = vmatmul.bf16.gmra.mxu0 %v401
    %v474 = vpop.f32.mrf.mxu0
    %v475 = vadd.f32 %v330, %v474
    %v476 = vpop.f32.mrf.mxu0
    %v477 = vadd.f32 %v332, %v476
    %478 = vmatmul.bf16.gmra.mxu0 %v402
    %v479 = vpop.f32.mrf.mxu0
    %v480 = vadd.f32 %v335, %v479
    %v481 = vpop.f32.mrf.mxu0
    %v482 = vadd.f32 %v337, %v481
    %483 = vmatmul.bf16.gmra.mxu0 %v403
    %v484 = vpop.f32.mrf.mxu0
    %v485 = vadd.f32 %v340, %v484
    %v486 = vpop.f32.mrf.mxu0
    %v487 = vadd.f32 %v342, %v486
    %488 = vmatmul.bf16.gmra.mxu0 %v404
    %v489 = vpop.f32.mrf.mxu0
    %v490 = vadd.f32 %v345, %v489
    %v491 = vpop.f32.mrf.mxu0
    %v492 = vadd.f32 %v347, %v491
    %493 = vmatmul.bf16.gmra.mxu0 %v405
    %v494 = vpop.f32.mrf.mxu0
    %v495 = vadd.f32 %v350, %v494
    %v496 = vpop.f32.mrf.mxu0
    %v497 = vadd.f32 %v352, %v496
    %498 = vmatmul.bf16.gmra.mxu0 %v406
    %v499 = vpop.f32.mrf.mxu0
    %v500 = vadd.f32 %v355, %v499
    %v501 = vpop.f32.mrf.mxu0
    %v502 = vadd.f32 %v357, %v501
    %503 = vmatmul.bf16.gmra.mxu0 %v407
    %v504 = vpop.f32.mrf.mxu0
    %v505 = vadd.f32 %v360, %v504
    %v506 = vpop.f32.mrf.mxu0
    %v507 = vadd.f32 %v362, %v506
    %508 = vmatmul.bf16.gmra.mxu0 %v408
    %v509 = vpop.f32.mrf.mxu0
    %v510 = vadd.f32 %v365, %v509
    %v511 = vpop.f32.mrf.mxu0
    %v512 = vadd.f32 %v367, %v511
    %513 = vdwg.mxu0
    %v514 = vld [vmem:[%s5] sm:$0x1]
    %v516 = vperm.slane %v514, 0
    %v518 = vadd.f32 %v475, %v516
    %v519 = vadd.f32 %v477, %v516
    %v520 = vadd.f32 %v480, %v516
    %v521 = vadd.f32 %v482, %v516
    %v522 = vadd.f32 %v485, %v516
    %v523 = vadd.f32 %v487, %v516
    %v524 = vadd.f32 %v490, %v516
    %v525 = vadd.f32 %v492, %v516
    %v526 = vadd.f32 %v495, %v516
    %v527 = vadd.f32 %v497, %v516
    %v528 = vadd.f32 %v500, %v516
    %v529 = vadd.f32 %v502, %v516
    %v530 = vadd.f32 %v505, %v516
    %v531 = vadd.f32 %v507, %v516
    %v532 = vadd.f32 %v510, %v516
    %v533 = vadd.f32 %v512, %v516
    %v534 = vmax.f32 %v518, 0.0
    %v535 = vmax.f32 %v519, 0.0
    %v536 = vmax.f32 %v520, 0.0
    %v537 = vmax.f32 %v521, 0.0
    %v538 = vmax.f32 %v522, 0.0
    %v539 = vmax.f32 %v523, 0.0
    %v540 = vmax.f32 %v524, 0.0
    %v541 = vmax.f32 %v525, 0.0
    %v542 = vmax.f32 %v526, 0.0
    %v543 = vmax.f32 %v527, 0.0
    %v544 = vmax.f32 %v528, 0.0
    %v545 = vmax.f32 %v529, 0.0
    %v546 = vmax.f32 %v530, 0.0
    %v547 = vmax.f32 %v531, 0.0
    %v548 = vmax.f32 %v532, 0.0
    %v549 = vmax.f32 %v533, 0.0
    %v550 = vpack.c.bf16 %v535, %v534
    %v551 = vpack.c.bf16 %v537, %v536
    %v552 = vpack.c.bf16 %v539, %v538
    %v553 = vpack.c.bf16 %v541, %v540
    %v554 = vpack.c.bf16 %v543, %v542
    %v555 = vpack.c.bf16 %v545, %v544
    %v556 = vpack.c.bf16 %v547, %v546
    %v557 = vpack.c.bf16 %v549, %v548
    %v558 = vld [vmem:[#allocation7] sm:$0xf]
    %v559 = vld [vmem:[#allocation7 + $0x4] sm:$0xf]
    %v560 = vld [vmem:[#allocation7 + $0x8] sm:$0xf]
    %v561 = vld [vmem:[#allocation7 + $0xc] sm:$0xf]
    %v562 = vld [vmem:[#allocation7 + $0x10] sm:$0xf]
    %v563 = vld [vmem:[#allocation7 + $0x14] sm:$0xf]
    %v564 = vld [vmem:[#allocation7 + $0x18] sm:$0xf]
    %v565 = vld [vmem:[#allocation7 + $0x1c] sm:$0xf]
    %v566 = vld [vmem:[#allocation7 + $0x20] sm:$0xf]
    %v567 = vld [vmem:[#allocation7 + $0x24] sm:$0xf]
    %v568 = vld [vmem:[#allocation7 + $0x28] sm:$0xf]
    %v569 = vld [vmem:[#allocation7 + $0x2c] sm:$0xf]
    %v570 = vld [vmem:[#allocation7 + $0x30] sm:$0xf]
    %v571 = vld [vmem:[#allocation7 + $0x34] sm:$0xf]
    %v572 = vld [vmem:[#allocation7 + $0x38] sm:$0xf]
    %v573 = vld [vmem:[#allocation7 + $0x3c] sm:$0xf]
    %v574 = vld [vmem:[%s7] sm:$0x1]
    %v576 = vperm.slane %v574, 0
    %v594 = vunpack.c.l.b16 %v558
    %v595 = vunpack.c.l.b16 %v559
    %v596 = vunpack.c.l.b16 %v560
    %v597 = vunpack.c.l.b16 %v561
    %v598 = vunpack.c.l.b16 %v562
    %v599 = vunpack.c.l.b16 %v563
    %v600 = vunpack.c.l.b16 %v564
    %v601 = vunpack.c.l.b16 %v565
    %v602 = vunpack.c.l.b16 %v566
    %v603 = vunpack.c.l.b16 %v567
    %v604 = vunpack.c.l.b16 %v568
    %v605 = vunpack.c.l.b16 %v569
    %v606 = vunpack.c.l.b16 %v570
    %v607 = vunpack.c.l.b16 %v571
    %v608 = vunpack.c.l.b16 %v572
    %v609 = vunpack.c.l.b16 %v573
    %v610 = vpack.c.b16 %v595, %v594
    %v611 = vpack.c.b16 %v597, %v596
    %v612 = vpack.c.b16 %v599, %v598
    %v613 = vpack.c.b16 %v601, %v600
    %v614 = vpack.c.b16 %v603, %v602
    %v615 = vpack.c.b16 %v605, %v604
    %v616 = vpack.c.b16 %v607, %v606
    %v617 = vpack.c.b16 %v609, %v608
    %626 = vmatpush.bf16.msra.mxu0 %v617
    %627 = vmatpush.bf16.msra.mxu0 %v616
    %628 = vmatpush.bf16.msra.mxu0 %v615
    %629 = vmatpush.bf16.msra.mxu0 %v614
    %630 = vmatpush.bf16.msra.mxu0 %v613
    %631 = vmatpush.bf16.msra.mxu0 %v612
    %632 = vmatpush.bf16.msra.mxu0 %v611
    %633 = vmatpush.bf16.msra.mxu0 %v610
    %634 = vmatmul.bf16.gmra.mxu0 %v550
    %v635 = vpop.f32.mrf.mxu0
    %v636 = vadd.f32 %v576, %v635
    %v637 = vpop.f32.mrf.mxu0
    %v638 = vadd.f32 %v576, %v637
    %639 = vmatmul.bf16.gmra.mxu0 %v551
    %v640 = vpop.f32.mrf.mxu0
    %v641 = vadd.f32 %v576, %v640
    %v642 = vpop.f32.mrf.mxu0
    %v643 = vadd.f32 %v576, %v642
    %644 = vmatmul.bf16.gmra.mxu0 %v552
    %v645 = vpop.f32.mrf.mxu0
    %v646 = vadd.f32 %v576, %v645
    %v647 = vpop.f32.mrf.mxu0
    %v648 = vadd.f32 %v576, %v647
    %649 = vmatmul.bf16.gmra.mxu0 %v553
    %v650 = vpop.f32.mrf.mxu0
    %v651 = vadd.f32 %v576, %v650
    %v652 = vpop.f32.mrf.mxu0
    %v653 = vadd.f32 %v576, %v652
    %654 = vmatmul.bf16.gmra.mxu0 %v554
    %v655 = vpop.f32.mrf.mxu0
    %v656 = vadd.f32 %v576, %v655
    %v657 = vpop.f32.mrf.mxu0
    %v658 = vadd.f32 %v576, %v657
    %659 = vmatmul.bf16.gmra.mxu0 %v555
    %v660 = vpop.f32.mrf.mxu0
    %v661 = vadd.f32 %v576, %v660
    %v662 = vpop.f32.mrf.mxu0
    %v663 = vadd.f32 %v576, %v662
    %664 = vmatmul.bf16.gmra.mxu0 %v556
    %v665 = vpop.f32.mrf.mxu0
    %v666 = vadd.f32 %v576, %v665
    %v667 = vpop.f32.mrf.mxu0
    %v668 = vadd.f32 %v576, %v667
    %669 = vmatmul.bf16.gmra.mxu0 %v557
    %v670 = vpop.f32.mrf.mxu0
    %v671 = vadd.f32 %v576, %v670
    %v672 = vpop.f32.mrf.mxu0
    %v673 = vadd.f32 %v576, %v672
    %674 = vdwg.mxu0
    %675 = vst [vmem:[#allocation8] sm:$0xff] %v636
    %676 = vst [vmem:[#allocation8 + $0x8] sm:$0xff] %v638
    %677 = vst [vmem:[#allocation8 + $0x10] sm:$0xff] %v641
    %678 = vst [vmem:[#allocation8 + $0x18] sm:$0xff] %v643
    %679 = vst [vmem:[#allocation8 + $0x20] sm:$0xff] %v646
    %680 = vst [vmem:[#allocation8 + $0x28] sm:$0xff] %v648
    %681 = vst [vmem:[#allocation8 + $0x30] sm:$0xff] %v651
    %682 = vst [vmem:[#allocation8 + $0x38] sm:$0xff] %v653
    %683 = vst [vmem:[#allocation8 + $0x40] sm:$0xff] %v656
    %684 = vst [vmem:[#allocation8 + $0x48] sm:$0xff] %v658
    %685 = vst [vmem:[#allocation8 + $0x50] sm:$0xff] %v661
    %686 = vst [vmem:[#allocation8 + $0x58] sm:$0xff] %v663
    %687 = vst [vmem:[#allocation8 + $0x60] sm:$0xff] %v666
    %688 = vst [vmem:[#allocation8 + $0x68] sm:$0xff] %v668
    %689 = vst [vmem:[#allocation8 + $0x70] sm:$0xff] %v671
    %690 = vst [vmem:[#allocation8 + $0x78] sm:$0xff] %v673
    // Predicated region
    $region46: #{tpu_custom_call.1} parent=1 // pred_check
      _
    $region47: #{tpu_custom_call.1} parent=1 // pred_check_branch
      %692 = sbr.rel (0) target = $region49
    $region48: #{tpu_custom_call.1} parent=1 // pred_region
      %694 = vsyncadd [#allocation4], 0
      %s695 = sshll.u32 [#allocation8], 4
      %s696 = int_to_ptr.vmem [resolvable:$true] %s695
      %s697 = sshll.u32 %s8, 4
      %s698 = int_to_ptr.hbm [resolvable:$true] %s697
      %703 = dma.vmem_to_hbm [thread:$0]  %s696, 2048, %s698, [#allocation4], 128, 128, 8
    $region49: #{tpu_custom_call.1} parent=1 // pred_fallthru
      _
    // Predicated region
    $region50: #{tpu_custom_call.1} parent=1 // pred_check
      _
    $region51: #{tpu_custom_call.1} parent=1 // pred_check_branch
      %705 = sbr.rel (0) target = $region53
    $region52: #{tpu_custom_call.1} parent=1 // pred_region
      %707 = dma.done [#allocation4], 2048
    $region53: #{tpu_custom_call.1} parent=1 // pred_fallthru
      _
    %708 = vsyncpa [#allocation3], 1
    %709 = vsyncpa [#allocation6], 1
    %710 = vsyncpa [#allocation4], 1

</llo_original>
